<compile_context>
chip_gen: v7x
topology: tpu7x:2x2x1
jax: 0.10.0
libtpu: 0.0.40
codegen_flags: <defaults>
</compile_context>

<pallas_src>
import functools

import jax
import jax.numpy as jnp
import numpy as np
from jax import lax
from jax.experimental import pallas as pl
from jax.experimental.pallas import tpu as pltpu


# --------------------------------------------------------------------------
# Sigma = SPDLogCholesky(M): tiny (d,d) op, plain JAX (per perf review).
# --------------------------------------------------------------------------
def _spd_log_cholesky(M):
    L = jnp.tril(M, k=-1) + jnp.diag(jnp.exp(jnp.diag(M)))
    return jnp.matmul(L, L.T, precision=lax.Precision.HIGHEST)


def _auto_compute_dtype():
    """bf16 slab math on bf16-native VPU/EUP generations (v6e/v7x), else f32."""
    try:
        kind = jax.devices()[0].device_kind.lower()
    except Exception:
        return jnp.float32
    if ("v6" in kind) or ("v7" in kind) or ("tpu7" in kind):
        return jnp.bfloat16
    return jnp.float32


# --------------------------------------------------------------------------
# Fused RKHS output kernel, tiled over (i, l) sample blocks
# --------------------------------------------------------------------------
def _sigma_rkhs_out_kernel(x_i_ref, x_lT_ref, alpha_ref, beta_ref, out_ref,
                           acc_ref, *, d, compute_dtype):
    # x_i_ref : (TI, d)    f32 rows of x/gamma for the current i tile
    # x_lT_ref: (d, TL)    f32 (x/gamma)^T cols for the current l tile
    # alpha   : (d, TL)    compute_dtype  alpha[:, l_tile]
    # beta    : (d*d, TL)  compute_dtype  pre-masked (a==j zeroed) beta * 2/gamma
    # out_ref : (d, TI)    f32 out[:, i_tile], written at the last l step
    # acc_ref : (d, TI)    f32 accumulator across l steps
    l_step = pl.program_id(1)

    @pl.when(l_step == 0)
    def _():
        acc_ref[...] = jnp.zeros_like(acc_ref)

    x_i = x_i_ref[...]            # (TI, d)  f32
    x_lT = x_lT_ref[...]          # (d, TL)  f32
    alpha = alpha_ref[...]        # (d, TL)
    beta = beta_ref[...]          # (d*d, TL)

    # Lane-dense diff slabs: diff[k][i, l] = (x[i0+i, k] - x[l0+l, k]) / gamma.
    # total[i, l] = sum_k diff[k]^2 (omega = 1 - I identity: sq_dist_j = total - diff_j^2).
    # Exp argument stays f32 for precision; slab math downstream uses compute_dtype.
    diff_f32 = []
    diff_c = []
    total = None
    for k in range(d):
        dk = x_i[:, k:k + 1] - x_lT[k:k + 1, :]                 # (TI, TL) f32
        diff_f32.append(dk)
        diff_c.append(dk.astype(compute_dtype))
        dk2 = dk * dk
        total = dk2 if total is None else total + dk2

    # NOTE: fully unrolled (d small); for d >~ 8-16 switch to a stacked VMEM
    # diff buffer + lax.fori_loop over j to bound live slab ranges.
    for j in range(d):
        dj = diff_f32[j]
        # K[j] = exp(-(total - diff_j^2)) (gamma already folded into x)
        k_j = jnp.exp(dj * dj - total).astype(compute_dtype)    # (TI, TL)
        # S[j][i, l] = sum_{a != j} beta'[j, a, l] * diff[a][i, l]  (2/g folded into beta')
        s_j = None
        for a in range(d):
            if a == j:                       # masked entries (pre-zeroed anyway)
                continue
            term = beta[j * d + a][None, :] * diff_c[a]
            s_j = term if s_j is None else s_j + term
        # Fused out1 + out2: W[j] = alpha[j, l] + S[j]
        w_j = alpha[j][None, :]
        if s_j is not None:
            w_j = w_j + s_j
        # l-reduction accumulated in f32 regardless of slab dtype.
        contrib = jnp.sum((k_j * w_j).astype(jnp.float32), axis=-1)   # (TI,)
        acc_ref[j, :] = acc_ref[j, :] + contrib

    @pl.when(l_step == pl.num_programs(1) - 1)
    def _():
        res = acc_ref[...]
        row = lax.broadcasted_iota(jnp.int32, res.shape, 0)
        out_ref[...] = jnp.where(row == 0, 0.0, res).astype(out_ref.dtype)   # output[:, 0] = 0


# --------------------------------------------------------------------------
# Wrapper
# --------------------------------------------------------------------------
def sigma_rkhs_forward(x, alpha, beta, M, gamma=1.0, compute_dtype=None):
    """Pallas implementation of Sigma_RKHSDagma.forward()."""
    x = jnp.asarray(x, jnp.float32)
    alpha = jnp.asarray(alpha, jnp.float32)          # (d, n)
    beta = jnp.asarray(beta, jnp.float32)            # (d, d, n)  [j, a, l]
    M = jnp.asarray(M, jnp.float32)                  # (d, d)
    n, d = x.shape

    if compute_dtype is None:
        compute_dtype = _auto_compute_dtype()

    # ---- Sigma (tiny (d,d) op; plain JAX, no extra kernel launch) ----
    sigma = _spd_log_cholesky(M)

    # ---- padding & tile selection (lane-dense, big tiles, megacore-aware) ----
    if n <= 128:
        n_pad = 128
    elif n <= 256:
        n_pad = 256
    else:
        n_pad = ((n + 511) // 512) * 512      # multiple of 512: no 128x128 fallback

    TL = min(512, n_pad)
    TI = min(512, n_pad)
    slab_budget = 18 * 1024 * 1024            # f32 worst-case in-kernel slab temporaries
    while (d + 6) * TI * TL * 4 > slab_budget and TL > 128:
        TL //= 2
    while (d + 6) * TI * TL * 4 > slab_budget and TI > 128:
        TI //= 2
    # v7x has 2 TensorCores: keep >= 2 grid steps on the "parallel" i axis.
    while n_pad // TI < 2 and TI > 128:
        TI //= 2

    pad = n_pad - n
    inv_g = 1.0 / float(gamma)

    # Fold gamma into the inputs once: x' = x/g, beta' = (masked beta) * 2/g.
    x_p = jnp.pad(x * inv_g, ((0, pad), (0, 0)))                       # (n_pad, d)
    xT_p = x_p.T                                                       # (d, n_pad)
    alpha_p = jnp.pad(alpha, ((0, 0), (0, pad))).astype(compute_dtype)  # (d, n_pad)
    beta_m = jnp.where(jnp.eye(d, dtype=bool)[:, :, None], 0.0, beta) * (2.0 * inv_g)
    beta_p = (jnp.pad(beta_m, ((0, 0), (0, 0), (0, pad)))
              .reshape(d * d, n_pad).astype(compute_dtype))            # (d*d, n_pad)

    grid = (n_pad // TI, n_pad // TL)

    slab_bytes = (d + 6) * TI * TL * 4
    vmem_limit = int(min(32 * 1024 * 1024, max(20 * 1024 * 1024, 2 * slab_bytes)))

    cost = pl.CostEstimate(
        flops=int(n_pad) * int(n_pad) * (2 * d * d + 8 * d),
        transcendentals=d * int(n_pad) * int(n_pad),
        bytes_accessed=int(x_p.size * 4 + xT_p.size * 4
                           + alpha_p.size * alpha_p.dtype.itemsize
                           + beta_p.size * beta_p.dtype.itemsize
                           + d * n_pad * 4),
    )

    kernel = functools.partial(_sigma_rkhs_out_kernel, d=d, compute_dtype=compute_dtype)

    out_dn = pl.pallas_call(
        kernel,
        out_shape=jax.ShapeDtypeStruct((d, n_pad), jnp.float32),
        grid_spec=pltpu.PrefetchScalarGridSpec(
            num_scalar_prefetch=0,
            grid=grid,
            in_specs=[
                pl.BlockSpec((TI, d), lambda i, l: (i, 0)),          # x rows (i tile)
                pl.BlockSpec((d, TL), lambda i, l: (0, l)),          # x^T cols (l tile)
                pl.BlockSpec((d, TL), lambda i, l: (0, l)),          # alpha
                pl.BlockSpec((d * d, TL), lambda i, l: (0, l)),      # beta' (pre-masked/scaled)
            ],
            out_specs=pl.BlockSpec((d, TI), lambda i, l: (0, i)),
            scratch_shapes=[pltpu.VMEM((d, TI), jnp.float32)],
        ),
        compiler_params=pltpu.CompilerParams(
            dimension_semantics=("parallel", "arbitrary"),
            vmem_limit_bytes=vmem_limit,
        ),
        cost_estimate=cost,
    )(x_p, xT_p, alpha_p, beta_p)

    # glue: drop sample padding, back to the PyTorch (n, d) output convention.
    out = out_dn[:, :n].T
    return sigma, out


# --------------------------------------------------------------------------
# Parameter init + plain-JAX reference (for correctness checking)
# --------------------------------------------------------------------------
def reverse_spd_logcholesky(key, d):
    """JAX port of reverse_SPDLogCholesky (parameter init; plain-JAX glue)."""
    cov = jax.random.uniform(key, (d, d), jnp.float32) * 0.1 - 0.05
    cov = jnp.triu(cov, k=1)
    sigma_init = cov + cov.T + jnp.eye(d, dtype=jnp.float32)
    L = jnp.linalg.cholesky(sigma_init)
    return jnp.tril(L, k=-1) + jnp.diag(jnp.log(jnp.diag(L)))


def reference_forward(x, alpha, beta, M, gamma=1.0):
    """Plain-JAX mirror of the PyTorch forward."""
    n, d = x.shape
    hi = lax.Precision.HIGHEST
    L = jnp.tril(M, k=-1) + jnp.diag(jnp.exp(jnp.diag(M)))
    Sigma = jnp.matmul(L, L.T, precision=hi)
    omega = jnp.ones((d, d), jnp.float32) - jnp.eye(d, dtype=jnp.float32)
    diff = x[:, None, :] - x[None, :, :]
    sq_dist = jnp.einsum('jk,ilk->jil', omega, diff ** 2, precision=hi)
    K = jnp.exp(-sq_dist / gamma ** 2)
    grad_K1 = (-2.0 / gamma ** 2) * jnp.einsum('jil,ila->jila', K, diff, precision=hi)
    mask = jnp.eye(d, dtype=bool).reshape(d, 1, 1, d)
    grad_K1 = jnp.where(mask, 0.0, grad_K1)
    grad_K2 = -grad_K1
    out1 = jnp.einsum('jl,jil->ij', alpha, K, precision=hi)
    out2 = jnp.einsum('jal,jila->ijl', beta, grad_K2, precision=hi).sum(axis=2)
    out = (out1 + out2).at[:, 0].set(0.0)
    return Sigma, out


if __name__ == "__main__":
    gamma = 1.0
    auto_dtype = _auto_compute_dtype()
    # (n, d): a tiny single-grid-step case and a padded multi-step grid case.
    for (n, d) in [(8, 4), (300, 5)]:
        key = jax.random.PRNGKey(0)
        kx, ka, kb, km = jax.random.split(key, 4)

        x = jax.random.normal(kx, (n, d), jnp.float32)
        # Module __init__ sets alpha/beta to zeros; use small deterministic
        # random values so the kernel's contractions are exercised non-trivially.
        alpha = 0.05 * jax.random.normal(ka, (d, n), jnp.float32)      # (d, n)
        beta = 0.05 * jax.random.normal(kb, (d, d, n), jnp.float32)    # (d, d, n)
        M = reverse_spd_logcholesky(km, d)                             # (d, d)

        sigma_r, out_r = reference_forward(x, alpha, beta, M, gamma)

        # ---- f32 path: tight check against the f32 reference ----
        sigma, out = sigma_rkhs_forward(x, alpha, beta, M, gamma,
                                        compute_dtype=jnp.float32)
        jax.block_until_ready((sigma, out))
        np.testing.assert_allclose(np.asarray(sigma), np.asarray(sigma_r),
                                   rtol=2e-2, atol=1e-4)
        np.testing.assert_allclose(np.asarray(out), np.asarray(out_r),
                                   rtol=2e-2, atol=1e-4)

        # ---- auto path (bf16 slab math on v6e/v7x): bf16-level tolerances ----
        sigma2, out2 = sigma_rkhs_forward(x, alpha, beta, M, gamma)
        jax.block_until_ready((sigma2, out2))
        if auto_dtype is jnp.bfloat16:
            rtol, atol = 5e-2, 2e-2    # bf16 slab math vs f32 reference
        else:
            rtol, atol = 2e-2, 1e-4
        np.testing.assert_allclose(np.asarray(sigma2), np.asarray(sigma_r),
                                   rtol=rtol, atol=atol)
        np.testing.assert_allclose(np.asarray(out2), np.asarray(out_r),
                                   rtol=rtol, atol=atol)

    print("KERNEL_OK")
</pallas_src>

<mosaic_0001>
module attributes {stable_mosaic.version = 11 : i64} {
  func.func @_sigma_rkhs_out_kernel(%arg0: i32, %arg1: i32, %arg2: memref<128x4xf32, #tpu.memory_space<vmem>>, %arg3: memref<4x128xf32, #tpu.memory_space<vmem>>, %arg4: memref<4x128xf32, #tpu.memory_space<vmem>>, %arg5: memref<16x128xf32, #tpu.memory_space<vmem>>, %arg6: memref<4x128xf32, #tpu.memory_space<vmem>>, %arg7: memref<4x128xf32, #tpu.memory_space<vmem>>) attributes {dimension_semantics = [#tpu.dimension_semantics<parallel>, #tpu.dimension_semantics<arbitrary>], iteration_bounds = array<i64: 1, 1>, scalar_prefetch = 0 : i64, scratch_operands = 1 : i64, tpu.core_type = #tpu.core_type<tc>, window_params = [{transform_indices = @transform_0, window_bounds = array<i64: 128, 4>}, {transform_indices = @transform_1, window_bounds = array<i64: 4, 128>}, {transform_indices = @transform_2, window_bounds = array<i64: 4, 128>}, {transform_indices = @transform_3, window_bounds = array<i64: 16, 128>}, {transform_indices = @transform_4, window_bounds = array<i64: 4, 128>}]} {
    %c0_i32 = arith.constant 0 : i32
    %0 = arith.cmpi eq, %arg1, %c0_i32 : i32
    %1 = arith.extui %0 : i1 to i32
    %c0_i32_0 = arith.constant 0 : i32
    %2 = arith.cmpi ne, %1, %c0_i32_0 : i32
    scf.if %2 {
      %cst_26 = arith.constant 0.000000e+00 : f32
      %169 = vector.broadcast %cst_26 : f32 to vector<4x128xf32>
      %c0_27 = arith.constant 0 : index
      %c0_28 = arith.constant 0 : index
      %170 = vector.load %arg7[%c0_27, %c0_28] : memref<4x128xf32, #tpu.memory_space<vmem>>, vector<4x128xf32>
      tpu.vector_store %arg7[%c0_27, %c0_28], %169 {strides = array<i32>} : memref<4x128xf32, #tpu.memory_space<vmem>>, vector<4x128xf32>,
    } else {
    }
    %c0 = arith.constant 0 : index
    %c0_1 = arith.constant 0 : index
    %3 = vector.load %arg2[%c0, %c0_1] : memref<128x4xf32, #tpu.memory_space<vmem>>, vector<128x4xf32>
    %c0_2 = arith.constant 0 : index
    %c0_3 = arith.constant 0 : index
    %4 = vector.load %arg3[%c0_2, %c0_3] : memref<4x128xf32, #tpu.memory_space<vmem>>, vector<4x128xf32>
    %c0_4 = arith.constant 0 : index
    %c0_5 = arith.constant 0 : index
    %5 = vector.load %arg4[%c0_4, %c0_5] : memref<4x128xf32, #tpu.memory_space<vmem>>, vector<4x128xf32>
    %c0_6 = arith.constant 0 : index
    %c0_7 = arith.constant 0 : index
    %6 = vector.load %arg5[%c0_6, %c0_7] : memref<16x128xf32, #tpu.memory_space<vmem>>, vector<16x128xf32>
    %7 = vector.extract_strided_slice %3 {offsets = [0, 0], sizes = [128, 1], strides = [1, 1]} : vector<128x4xf32> to vector<128x1xf32>
    %8 = vector.extract_strided_slice %4 {offsets = [0, 0], sizes = [1, 128], strides = [1, 1]} : vector<4x128xf32> to vector<1x128xf32>
    %9 = vector.broadcast %7 : vector<128x1xf32> to vector<128x128xf32>
    %10 = vector.broadcast %8 : vector<1x128xf32> to vector<128x128xf32>
    %11 = arith.subf %9, %10 : vector<128x128xf32>
    %12 = arith.mulf %11, %11 : vector<128x128xf32>
    %13 = vector.extract_strided_slice %3 {offsets = [0, 1], sizes = [128, 1], strides = [1, 1]} : vector<128x4xf32> to vector<128x1xf32>
    %14 = vector.extract_strided_slice %4 {offsets = [1, 0], sizes = [1, 128], strides = [1, 1]} : vector<4x128xf32> to vector<1x128xf32>
    %15 = vector.broadcast %13 : vector<128x1xf32> to vector<128x128xf32>
    %16 = vector.broadcast %14 : vector<1x128xf32> to vector<128x128xf32>
    %17 = arith.subf %15, %16 : vector<128x128xf32>
    %18 = arith.mulf %17, %17 : vector<128x128xf32>
    %19 = arith.addf %12, %18 : vector<128x128xf32>
    %20 = vector.extract_strided_slice %3 {offsets = [0, 2], sizes = [128, 1], strides = [1, 1]} : vector<128x4xf32> to vector<128x1xf32>
    %21 = vector.extract_strided_slice %4 {offsets = [2, 0], sizes = [1, 128], strides = [1, 1]} : vector<4x128xf32> to vector<1x128xf32>
    %22 = vector.broadcast %20 : vector<128x1xf32> to vector<128x128xf32>
    %23 = vector.broadcast %21 : vector<1x128xf32> to vector<128x128xf32>
    %24 = arith.subf %22, %23 : vector<128x128xf32>
    %25 = arith.mulf %24, %24 : vector<128x128xf32>
    %26 = arith.addf %19, %25 : vector<128x128xf32>
    %27 = vector.extract_strided_slice %3 {offsets = [0, 3], sizes = [128, 1], strides = [1, 1]} : vector<128x4xf32> to vector<128x1xf32>
    %28 = vector.extract_strided_slice %4 {offsets = [3, 0], sizes = [1, 128], strides = [1, 1]} : vector<4x128xf32> to vector<1x128xf32>
    %29 = vector.broadcast %27 : vector<128x1xf32> to vector<128x128xf32>
    %30 = vector.broadcast %28 : vector<1x128xf32> to vector<128x128xf32>
    %31 = arith.subf %29, %30 : vector<128x128xf32>
    %32 = arith.mulf %31, %31 : vector<128x128xf32>
    %33 = arith.addf %26, %32 : vector<128x128xf32>
    %34 = arith.mulf %11, %11 : vector<128x128xf32>
    %35 = arith.subf %34, %33 : vector<128x128xf32>
    %36 = math.exp %35 : vector<128x128xf32>
    %37 = vector.extract_strided_slice %6 {offsets = [1, 0], sizes = [1, 128], strides = [1, 1]} : vector<16x128xf32> to vector<1x128xf32>
    %38 = vector.shape_cast %37 : vector<1x128xf32> to vector<128xf32>
    %39 = vector.shape_cast %38 : vector<128xf32> to vector<1x128xf32>
    %40 = vector.broadcast %39 : vector<1x128xf32> to vector<128x128xf32>
    %41 = arith.mulf %40, %17 : vector<128x128xf32>
    %42 = vector.extract_strided_slice %6 {offsets = [2, 0], sizes = [1, 128], strides = [1, 1]} : vector<16x128xf32> to vector<1x128xf32>
    %43 = vector.shape_cast %42 : vector<1x128xf32> to vector<128xf32>
    %44 = vector.shape_cast %43 : vector<128xf32> to vector<1x128xf32>
    %45 = vector.broadcast %44 : vector<1x128xf32> to vector<128x128xf32>
    %46 = arith.mulf %45, %24 : vector<128x128xf32>
    %47 = arith.addf %41, %46 : vector<128x128xf32>
    %48 = vector.extract_strided_slice %6 {offsets = [3, 0], sizes = [1, 128], strides = [1, 1]} : vector<16x128xf32> to vector<1x128xf32>
    %49 = vector.shape_cast %48 : vector<1x128xf32> to vector<128xf32>
    %50 = vector.shape_cast %49 : vector<128xf32> to vector<1x128xf32>
    %51 = vector.broadcast %50 : vector<1x128xf32> to vector<128x128xf32>
    %52 = arith.mulf %51, %31 : vector<128x128xf32>
    %53 = arith.addf %47, %52 : vector<128x128xf32>
    %54 = vector.extract_strided_slice %5 {offsets = [0, 0], sizes = [1, 128], strides = [1, 1]} : vector<4x128xf32> to vector<1x128xf32>
    %55 = vector.shape_cast %54 : vector<1x128xf32> to vector<128xf32>
    %56 = vector.shape_cast %55 : vector<128xf32> to vector<1x128xf32>
    %57 = vector.broadcast %56 : vector<1x128xf32> to vector<128x128xf32>
    %58 = arith.addf %57, %53 : vector<128x128xf32>
    %59 = arith.mulf %36, %58 : vector<128x128xf32>
    %cst = arith.constant dense<0.000000e+00> : vector<128xf32>
    %60 = vector.multi_reduction <add>, %59, %cst [1] : vector<128x128xf32> to vector<128xf32>
    %c0_8 = arith.constant 0 : index
    %c0_9 = arith.constant 0 : index
    %61 = vector.load %arg7[%c0_8, %c0_9] : memref<4x128xf32, #tpu.memory_space<vmem>>, vector<1x128xf32>
    %62 = vector.shape_cast %61 : vector<1x128xf32> to vector<128xf32>
    %63 = arith.addf %62, %60 : vector<128xf32>
    %c0_10 = arith.constant 0 : index
    %c0_11 = arith.constant 0 : index
    %64 = vector.load %arg7[%c0_10, %c0_11] : memref<4x128xf32, #tpu.memory_space<vmem>>, vector<1x128xf32>
    %65 = vector.shape_cast %64 : vector<1x128xf32> to vector<128xf32>
    %66 = vector.shape_cast %63 : vector<128xf32> to vector<1x128xf32>
    tpu.vector_store %arg7[%c0_10, %c0_11], %66 {strides = array<i32>} : memref<4x128xf32, #tpu.memory_space<vmem>>, vector<1x128xf32>,
    %67 = arith.mulf %17, %17 : vector<128x128xf32>
    %68 = arith.subf %67, %33 : vector<128x128xf32>
    %69 = math.exp %68 : vector<128x128xf32>
    %70 = vector.extract_strided_slice %6 {offsets = [4, 0], sizes = [1, 128], strides = [1, 1]} : vector<16x128xf32> to vector<1x128xf32>
    %71 = vector.shape_cast %70 : vector<1x128xf32> to vector<128xf32>
    %72 = vector.shape_cast %71 : vector<128xf32> to vector<1x128xf32>
    %73 = vector.broadcast %72 : vector<1x128xf32> to vector<128x128xf32>
    %74 = arith.mulf %73, %11 : vector<128x128xf32>
    %75 = vector.extract_strided_slice %6 {offsets = [6, 0], sizes = [1, 128], strides = [1, 1]} : vector<16x128xf32> to vector<1x128xf32>
    %76 = vector.shape_cast %75 : vector<1x128xf32> to vector<128xf32>
    %77 = vector.shape_cast %76 : vector<128xf32> to vector<1x128xf32>
    %78 = vector.broadcast %77 : vector<1x128xf32> to vector<128x128xf32>
    %79 = arith.mulf %78, %24 : vector<128x128xf32>
    %80 = arith.addf %74, %79 : vector<128x128xf32>
    %81 = vector.extract_strided_slice %6 {offsets = [7, 0], sizes = [1, 128], strides = [1, 1]} : vector<16x128xf32> to vector<1x128xf32>
    %82 = vector.shape_cast %81 : vector<1x128xf32> to vector<128xf32>
    %83 = vector.shape_cast %82 : vector<128xf32> to vector<1x128xf32>
    %84 = vector.broadcast %83 : vector<1x128xf32> to vector<128x128xf32>
    %85 = arith.mulf %84, %31 : vector<128x128xf32>
    %86 = arith.addf %80, %85 : vector<128x128xf32>
    %87 = vector.extract_strided_slice %5 {offsets = [1, 0], sizes = [1, 128], strides = [1, 1]} : vector<4x128xf32> to vector<1x128xf32>
    %88 = vector.shape_cast %87 : vector<1x128xf32> to vector<128xf32>
    %89 = vector.shape_cast %88 : vector<128xf32> to vector<1x128xf32>
    %90 = vector.broadcast %89 : vector<1x128xf32> to vector<128x128xf32>
    %91 = arith.addf %90, %86 : vector<128x128xf32>
    %92 = arith.mulf %69, %91 : vector<128x128xf32>
    %cst_12 = arith.constant dense<0.000000e+00> : vector<128xf32>
    %93 = vector.multi_reduction <add>, %92, %cst_12 [1] : vector<128x128xf32> to vector<128xf32>
    %c1 = arith.constant 1 : index
    %c0_13 = arith.constant 0 : index
    %94 = vector.load %arg7[%c1, %c0_13] : memref<4x128xf32, #tpu.memory_space<vmem>>, vector<1x128xf32>
    %95 = vector.shape_cast %94 : vector<1x128xf32> to vector<128xf32>
    %96 = arith.addf %95, %93 : vector<128xf32>
    %c1_14 = arith.constant 1 : index
    %c0_15 = arith.constant 0 : index
    %97 = vector.load %arg7[%c1_14, %c0_15] : memref<4x128xf32, #tpu.memory_space<vmem>>, vector<1x128xf32>
    %98 = vector.shape_cast %97 : vector<1x128xf32> to vector<128xf32>
    %99 = vector.shape_cast %96 : vector<128xf32> to vector<1x128xf32>
    tpu.vector_store %arg7[%c1_14, %c0_15], %99 {strides = array<i32>} : memref<4x128xf32, #tpu.memory_space<vmem>>, vector<1x128xf32>,
    %100 = arith.mulf %24, %24 : vector<128x128xf32>
    %101 = arith.subf %100, %33 : vector<128x128xf32>
    %102 = math.exp %101 : vector<128x128xf32>
    %103 = vector.extract_strided_slice %6 {offsets = [8, 0], sizes = [1, 128], strides = [1, 1]} : vector<16x128xf32> to vector<1x128xf32>
    %104 = vector.shape_cast %103 : vector<1x128xf32> to vector<128xf32>
    %105 = vector.shape_cast %104 : vector<128xf32> to vector<1x128xf32>
    %106 = vector.broadcast %105 : vector<1x128xf32> to vector<128x128xf32>
    %107 = arith.mulf %106, %11 : vector<128x128xf32>
    %108 = vector.extract_strided_slice %6 {offsets = [9, 0], sizes = [1, 128], strides = [1, 1]} : vector<16x128xf32> to vector<1x128xf32>
    %109 = vector.shape_cast %108 : vector<1x128xf32> to vector<128xf32>
    %110 = vector.shape_cast %109 : vector<128xf32> to vector<1x128xf32>
    %111 = vector.broadcast %110 : vector<1x128xf32> to vector<128x128xf32>
    %112 = arith.mulf %111, %17 : vector<128x128xf32>
    %113 = arith.addf %107, %112 : vector<128x128xf32>
    %114 = vector.extract_strided_slice %6 {offsets = [11, 0], sizes = [1, 128], strides = [1, 1]} : vector<16x128xf32> to vector<1x128xf32>
    %115 = vector.shape_cast %114 : vector<1x128xf32> to vector<128xf32>
    %116 = vector.shape_cast %115 : vector<128xf32> to vector<1x128xf32>
    %117 = vector.broadcast %116 : vector<1x128xf32> to vector<128x128xf32>
    %118 = arith.mulf %117, %31 : vector<128x128xf32>
    %119 = arith.addf %113, %118 : vector<128x128xf32>
    %120 = vector.extract_strided_slice %5 {offsets = [2, 0], sizes = [1, 128], strides = [1, 1]} : vector<4x128xf32> to vector<1x128xf32>
    %121 = vector.shape_cast %120 : vector<1x128xf32> to vector<128xf32>
    %122 = vector.shape_cast %121 : vector<128xf32> to vector<1x128xf32>
    %123 = vector.broadcast %122 : vector<1x128xf32> to vector<128x128xf32>
    %124 = arith.addf %123, %119 : vector<128x128xf32>
    %125 = arith.mulf %102, %124 : vector<128x128xf32>
    %cst_16 = arith.constant dense<0.000000e+00> : vector<128xf32>
    %126 = vector.multi_reduction <add>, %125, %cst_16 [1] : vector<128x128xf32> to vector<128xf32>
    %c2 = arith.constant 2 : index
    %c0_17 = arith.constant 0 : index
    %127 = vector.load %arg7[%c2, %c0_17] : memref<4x128xf32, #tpu.memory_space<vmem>>, vector<1x128xf32>
    %128 = vector.shape_cast %127 : vector<1x128xf32> to vector<128xf32>
    %129 = arith.addf %128, %126 : vector<128xf32>
    %c2_18 = arith.constant 2 : index
    %c0_19 = arith.constant 0 : index
    %130 = vector.load %arg7[%c2_18, %c0_19] : memref<4x128xf32, #tpu.memory_space<vmem>>, vector<1x128xf32>
    %131 = vector.shape_cast %130 : vector<1x128xf32> to vector<128xf32>
    %132 = vector.shape_cast %129 : vector<128xf32> to vector<1x128xf32>
    tpu.vector_store %arg7[%c2_18, %c0_19], %132 {strides = array<i32>} : memref<4x128xf32, #tpu.memory_space<vmem>>, vector<1x128xf32>,
    %133 = arith.mulf %31, %31 : vector<128x128xf32>
    %134 = arith.subf %133, %33 : vector<128x128xf32>
    %135 = math.exp %134 : vector<128x128xf32>
    %136 = vector.extract_strided_slice %6 {offsets = [12, 0], sizes = [1, 128], strides = [1, 1]} : vector<16x128xf32> to vector<1x128xf32>
    %137 = vector.shape_cast %136 : vector<1x128xf32> to vector<128xf32>
    %138 = vector.shape_cast %137 : vector<128xf32> to vector<1x128xf32>
    %139 = vector.broadcast %138 : vector<1x128xf32> to vector<128x128xf32>
    %140 = arith.mulf %139, %11 : vector<128x128xf32>
    %141 = vector.extract_strided_slice %6 {offsets = [13, 0], sizes = [1, 128], strides = [1, 1]} : vector<16x128xf32> to vector<1x128xf32>
    %142 = vector.shape_cast %141 : vector<1x128xf32> to vector<128xf32>
    %143 = vector.shape_cast %142 : vector<128xf32> to vector<1x128xf32>
    %144 = vector.broadcast %143 : vector<1x128xf32> to vector<128x128xf32>
    %145 = arith.mulf %144, %17 : vector<128x128xf32>
    %146 = arith.addf %140, %145 : vector<128x128xf32>
    %147 = vector.extract_strided_slice %6 {offsets = [14, 0], sizes = [1, 128], strides = [1, 1]} : vector<16x128xf32> to vector<1x128xf32>
    %148 = vector.shape_cast %147 : vector<1x128xf32> to vector<128xf32>
    %149 = vector.shape_cast %148 : vector<128xf32> to vector<1x128xf32>
    %150 = vector.broadcast %149 : vector<1x128xf32> to vector<128x128xf32>
    %151 = arith.mulf %150, %24 : vector<128x128xf32>
    %152 = arith.addf %146, %151 : vector<128x128xf32>
    %153 = vector.extract_strided_slice %5 {offsets = [3, 0], sizes = [1, 128], strides = [1, 1]} : vector<4x128xf32> to vector<1x128xf32>
    %154 = vector.shape_cast %153 : vector<1x128xf32> to vector<128xf32>
    %155 = vector.shape_cast %154 : vector<128xf32> to vector<1x128xf32>
    %156 = vector.broadcast %155 : vector<1x128xf32> to vector<128x128xf32>
    %157 = arith.addf %156, %152 : vector<128x128xf32>
    %158 = arith.mulf %135, %157 : vector<128x128xf32>
    %cst_20 = arith.constant dense<0.000000e+00> : vector<128xf32>
    %159 = vector.multi_reduction <add>, %158, %cst_20 [1] : vector<128x128xf32> to vector<128xf32>
    %c3 = arith.constant 3 : index
    %c0_21 = arith.constant 0 : index
    %160 = vector.load %arg7[%c3, %c0_21] : memref<4x128xf32, #tpu.memory_space<vmem>>, vector<1x128xf32>
    %161 = vector.shape_cast %160 : vector<1x128xf32> to vector<128xf32>
    %162 = arith.addf %161, %159 : vector<128xf32>
    %c3_22 = arith.constant 3 : index
    %c0_23 = arith.constant 0 : index
    %163 = vector.load %arg7[%c3_22, %c0_23] : memref<4x128xf32, #tpu.memory_space<vmem>>, vector<1x128xf32>
    %164 = vector.shape_cast %163 : vector<1x128xf32> to vector<128xf32>
    %165 = vector.shape_cast %162 : vector<128xf32> to vector<1x128xf32>
    tpu.vector_store %arg7[%c3_22, %c0_23], %165 {strides = array<i32>} : memref<4x128xf32, #tpu.memory_space<vmem>>, vector<1x128xf32>,
    %c0_i32_24 = arith.constant 0 : i32
    %166 = arith.cmpi eq, %arg1, %c0_i32_24 : i32
    %167 = arith.extui %166 : i1 to i32
    %c0_i32_25 = arith.constant 0 : i32
    %168 = arith.cmpi ne, %167, %c0_i32_25 : i32
    scf.if %168 {
      %c0_26 = arith.constant 0 : index
      %c0_27 = arith.constant 0 : index
      %169 = vector.load %arg7[%c0_26, %c0_27] : memref<4x128xf32, #tpu.memory_space<vmem>>, vector<4x128xf32>
      %170 = tpu.iota {dimensions = array<i32: 0>} : vector<4x128xi32>
      %c0_i32_28 = arith.constant 0 : i32
      %171 = vector.broadcast %c0_i32_28 : i32 to vector<4x128xi32>
      %172 = arith.cmpi eq, %170, %171 : vector<4x128xi32>
      %cst_29 = arith.constant 0.000000e+00 : f32
      %173 = vector.broadcast %cst_29 : f32 to vector<4x128xf32>
      %174 = arith.select %172, %173, %169 : vector<4x128xi1>, vector<4x128xf32>
      %c0_30 = arith.constant 0 : index
      %c0_31 = arith.constant 0 : index
      %175 = vector.load %arg6[%c0_30, %c0_31] : memref<4x128xf32, #tpu.memory_space<vmem>>, vector<4x128xf32>
      tpu.vector_store %arg6[%c0_30, %c0_31], %174 {strides = array<i32>} : memref<4x128xf32, #tpu.memory_space<vmem>>, vector<4x128xf32>,
    } else {
    }
    return
  }
  func.func @transform_0(%arg0: i32, %arg1: i32) -> (i32, i32) {
    %c0_i32 = arith.constant 0 : i32
    %c0_i32_0 = arith.constant 0 : i32
    return %arg0, %c0_i32 : i32, i32
  }
  func.func @transform_1(%arg0: i32, %arg1: i32) -> (i32, i32) {
    %c0_i32 = arith.constant 0 : i32
    %c0_i32_0 = arith.constant 0 : i32
    return %c0_i32, %arg1 : i32, i32
  }
  func.func @transform_2(%arg0: i32, %arg1: i32) -> (i32, i32) {
    %c0_i32 = arith.constant 0 : i32
    %c0_i32_0 = arith.constant 0 : i32
    return %c0_i32, %arg1 : i32, i32
  }
  func.func @transform_3(%arg0: i32, %arg1: i32) -> (i32, i32) {
    %c0_i32 = arith.constant 0 : i32
    %c0_i32_0 = arith.constant 0 : i32
    return %c0_i32, %arg1 : i32, i32
  }
  func.func @transform_4(%arg0: i32, %arg1: i32) -> (i32, i32) {
    %c0_i32 = arith.constant 0 : i32
    %c0_i32_0 = arith.constant 0 : i32
    return %c0_i32, %arg0 : i32, i32
  }
}

</mosaic_0001>

<llo_original>
// kernel: tpu_custom_call.1
$region0: #{tpu_custom_call.1}
  #allocation0 [shape = 'u32[]', space=smem, size = 0x4, offset = 0x4, fixed_abs, tag = 'smem constant byte address 0x4 - core index']
  #allocation1 [shape = 'u32[144,128]{1,0:T(1,128)}', space=vmem, size = 0x12000, scoped, tag = 'internal scratch']
  #allocation2 [shape = 'f32[4,128]{1,0:T(4,128)}', space=vmem, size = 0x800, scoped, tag = 'scratch operand']
  %s0 = inlined_call_operand.vmem [shape: f32[128,4], index: 0, kind: input, shape index: {}]
  %s1 = inlined_call_operand.vmem [shape: f32[4,128], index: 1, kind: input, shape index: {}]
  %s2 = inlined_call_operand.vmem [shape: f32[4,128], index: 2, kind: input, shape index: {}]
  %s3 = inlined_call_operand.vmem [shape: f32[16,128], index: 3, kind: input, shape index: {}]
  %s4 = inlined_call_operand.hbm [shape: f32[4,128], index: 4, kind: output, shape index: {}]
  %s5 = sld [smem:[#allocation0]]
  $region34: #{tpu_custom_call.1} parent=0
    _
  %s7 = ssub.s32 1, %s5
  %s8 = scalar_select 0, %s7, %s5
  $region1: #{tpu_custom_call.1} parent=0
    #allocation3 [shape = 'u8[2048]{0}', space=vmem, size = 0x800, scoped, tag = 'output window, operand 0, single buffered']
    #allocation4 [shape = 's32[1]{0}', space=sflag, size = 0x4, scoped, tag = 'scoped memory for tpu_custom_call.1']
    %9 = vsyncpa [#allocation4], 0
    // Predicated region
    $region2: #{tpu_custom_call.1} parent=1 // pred_check
      _
    $region3: #{tpu_custom_call.1} parent=1 // pred_check_branch
      %11 = sbr.rel (0) target = $region5
    $region4: #{tpu_custom_call.1} parent=1 // pred_region
      _
    $region5: #{tpu_custom_call.1} parent=1 // pred_fallthru
      _
    // Predicated region
    $region6: #{tpu_custom_call.1} parent=1 // pred_check
      _
    $region7: #{tpu_custom_call.1} parent=1 // pred_check_branch
      %13 = sbr.rel (0) target = $region9
    $region8: #{tpu_custom_call.1} parent=1 // pred_region
      _
    $region9: #{tpu_custom_call.1} parent=1 // pred_fallthru
      _
    // Predicated region
    $region10: #{tpu_custom_call.1} parent=1 // pred_check
      _
    $region11: #{tpu_custom_call.1} parent=1 // pred_check_branch
      %15 = sbr.rel (0) target = $region13
    $region12: #{tpu_custom_call.1} parent=1 // pred_region
      _
    $region13: #{tpu_custom_call.1} parent=1 // pred_fallthru
      _
    // Predicated region
    $region14: #{tpu_custom_call.1} parent=1 // pred_check
      _
    $region15: #{tpu_custom_call.1} parent=1 // pred_check_branch
      %17 = sbr.rel (0) target = $region17
    $region16: #{tpu_custom_call.1} parent=1 // pred_region
      _
    $region17: #{tpu_custom_call.1} parent=1 // pred_fallthru
      _
    %p18 = scmp.eq.s32.totalorder 0, 0
    // Predicated region
    $region18: #{tpu_custom_call.1} parent=1 // pred_check
      %p19 = pneg %p18
    $region19: #{tpu_custom_call.1} parent=1 // pred_check_branch
      %21 = sbr.rel (%p19) target = $region21
    $region20: #{tpu_custom_call.1} parent=1 // pred_region
      %22 = vst [vmem:[#allocation2] sm:$0xf] 0.0
    $region21: #{tpu_custom_call.1} parent=1 // pred_fallthru
      _
    %v23 = vld [vmem:[%s0] sm:$0xff]
    %v24 = vld [vmem:[%s0 + $0x8] sm:$0xff]
    %v25 = vld [vmem:[%s0 + $0x10] sm:$0xff]
    %v26 = vld [vmem:[%s0 + $0x18] sm:$0xff]
    %v27 = vld [vmem:[%s0 + $0x20] sm:$0xff]
    %v28 = vld [vmem:[%s0 + $0x28] sm:$0xff]
    %v29 = vld [vmem:[%s0 + $0x30] sm:$0xff]
    %v30 = vld [vmem:[%s0 + $0x38] sm:$0xff]
    %v31 = vld [vmem:[%s0 + $0x40] sm:$0xff]
    %v32 = vld [vmem:[%s0 + $0x48] sm:$0xff]
    %v33 = vld [vmem:[%s0 + $0x50] sm:$0xff]
    %v34 = vld [vmem:[%s0 + $0x58] sm:$0xff]
    %v35 = vld [vmem:[%s0 + $0x60] sm:$0xff]
    %v36 = vld [vmem:[%s0 + $0x68] sm:$0xff]
    %v37 = vld [vmem:[%s0 + $0x70] sm:$0xff]
    %v38 = vld [vmem:[%s0 + $0x78] sm:$0xff]
    %v39 = vld [vmem:[%s1] sm:$0xf]
    %v40 = vld [vmem:[%s2] sm:$0xf]
    %v41 = vld [vmem:[%s3] sm:$0xff]
    %v42 = vld [vmem:[%s3 + $0x8] sm:$0xff]
    %44 = vset.pattern.permute.xlu0 0
    %45 = vperm.xlu0 %44, %v23
    %v46 = vpop.permute.xlu0 %45
    %49 = vset.pattern.permute.xlu0 0
    %50 = vperm.xlu0 %49, %v24
    %v51 = vpop.permute.xlu0 %50
    %54 = vset.pattern.permute.xlu0 0
    %55 = vperm.xlu0 %54, %v25
    %v56 = vpop.permute.xlu0 %55
    %59 = vset.pattern.permute.xlu0 0
    %60 = vperm.xlu0 %59, %v26
    %v61 = vpop.permute.xlu0 %60
    %64 = vset.pattern.permute.xlu0 0
    %65 = vperm.xlu0 %64, %v27
    %v66 = vpop.permute.xlu0 %65
    %69 = vset.pattern.permute.xlu0 0
    %70 = vperm.xlu0 %69, %v28
    %v71 = vpop.permute.xlu0 %70
    %74 = vset.pattern.permute.xlu0 0
    %75 = vperm.xlu0 %74, %v29
    %v76 = vpop.permute.xlu0 %75
    %79 = vset.pattern.permute.xlu0 0
    %80 = vperm.xlu0 %79, %v30
    %v81 = vpop.permute.xlu0 %80
    %84 = vset.pattern.permute.xlu0 0
    %85 = vperm.xlu0 %84, %v31
    %v86 = vpop.permute.xlu0 %85
    %89 = vset.pattern.permute.xlu0 0
    %90 = vperm.xlu0 %89, %v32
    %v91 = vpop.permute.xlu0 %90
    %94 = vset.pattern.permute.xlu0 0
    %95 = vperm.xlu0 %94, %v33
    %v96 = vpop.permute.xlu0 %95
    %99 = vset.pattern.permute.xlu0 0
    %100 = vperm.xlu0 %99, %v34
    %v101 = vpop.permute.xlu0 %100
    %104 = vset.pattern.permute.xlu0 0
    %105 = vperm.xlu0 %104, %v35
    %v106 = vpop.permute.xlu0 %105
    %109 = vset.pattern.permute.xlu0 0
    %110 = vperm.xlu0 %109, %v36
    %v111 = vpop.permute.xlu0 %110
    %114 = vset.pattern.permute.xlu0 0
    %115 = vperm.xlu0 %114, %v37
    %v116 = vpop.permute.xlu0 %115
    %119 = vset.pattern.permute.xlu0 0
    %120 = vperm.xlu0 %119, %v38
    %v121 = vpop.permute.xlu0 %120
    %v123 = vlaneseq
    %v124 = vshrl.u32 %v123, 7
    %v125 = vsub.s32 0, %v124
    %v126 = vrot.slane %v39, %v125
    %v127 = vsub.f32 %v46, %v126
    %v128 = vsub.f32 %v51, %v126
    %v129 = vsub.f32 %v56, %v126
    %v130 = vsub.f32 %v61, %v126
    %v131 = vsub.f32 %v66, %v126
    %v132 = vsub.f32 %v71, %v126
    %v133 = vsub.f32 %v76, %v126
    %v134 = vsub.f32 %v81, %v126
    %v135 = vsub.f32 %v86, %v126
    %v136 = vsub.f32 %v91, %v126
    %v137 = vsub.f32 %v96, %v126
    %v138 = vsub.f32 %v101, %v126
    %v139 = vsub.f32 %v106, %v126
    %v140 = vsub.f32 %v111, %v126
    %v141 = vsub.f32 %v116, %v126
    %v142 = vsub.f32 %v121, %v126
    %v143 = vmul.f32 %v127, %v127
    %v144 = vmul.f32 %v128, %v128
    %v145 = vmul.f32 %v129, %v129
    %v146 = vmul.f32 %v130, %v130
    %v147 = vmul.f32 %v131, %v131
    %v148 = vmul.f32 %v132, %v132
    %v149 = vmul.f32 %v133, %v133
    %v150 = vmul.f32 %v134, %v134
    %v151 = vmul.f32 %v135, %v135
    %v152 = vmul.f32 %v136, %v136
    %v153 = vmul.f32 %v137, %v137
    %v154 = vmul.f32 %v138, %v138
    %v155 = vmul.f32 %v139, %v139
    %v156 = vmul.f32 %v140, %v140
    %v157 = vmul.f32 %v141, %v141
    %v158 = vmul.f32 %v142, %v142
    %159 = vset.pattern.permute.xlu0 1
    %160 = vperm.xlu0 %159, %v23
    %v161 = vpop.permute.xlu0 %160
    %163 = vset.pattern.permute.xlu0 1
    %164 = vperm.xlu0 %163, %v24
    %v165 = vpop.permute.xlu0 %164
    %167 = vset.pattern.permute.xlu0 1
    %168 = vperm.xlu0 %167, %v25
    %v169 = vpop.permute.xlu0 %168
    %171 = vset.pattern.permute.xlu0 1
    %172 = vperm.xlu0 %171, %v26
    %v173 = vpop.permute.xlu0 %172
    %175 = vset.pattern.permute.xlu0 1
    %176 = vperm.xlu0 %175, %v27
    %v177 = vpop.permute.xlu0 %176
    %179 = vset.pattern.permute.xlu0 1
    %180 = vperm.xlu0 %179, %v28
    %v181 = vpop.permute.xlu0 %180
    %183 = vset.pattern.permute.xlu0 1
    %184 = vperm.xlu0 %183, %v29
    %v185 = vpop.permute.xlu0 %184
    %187 = vset.pattern.permute.xlu0 1
    %188 = vperm.xlu0 %187, %v30
    %v189 = vpop.permute.xlu0 %188
    %191 = vset.pattern.permute.xlu0 1
    %192 = vperm.xlu0 %191, %v31
    %v193 = vpop.permute.xlu0 %192
    %195 = vset.pattern.permute.xlu0 1
    %196 = vperm.xlu0 %195, %v32
    %v197 = vpop.permute.xlu0 %196
    %199 = vset.pattern.permute.xlu0 1
    %200 = vperm.xlu0 %199, %v33
    %v201 = vpop.permute.xlu0 %200
    %203 = vset.pattern.permute.xlu0 1
    %204 = vperm.xlu0 %203, %v34
    %v205 = vpop.permute.xlu0 %204
    %207 = vset.pattern.permute.xlu0 1
    %208 = vperm.xlu0 %207, %v35
    %v209 = vpop.permute.xlu0 %208
    %211 = vset.pattern.permute.xlu0 1
    %212 = vperm.xlu0 %211, %v36
    %v213 = vpop.permute.xlu0 %212
    %215 = vset.pattern.permute.xlu0 1
    %216 = vperm.xlu0 %215, %v37
    %v217 = vpop.permute.xlu0 %216
    %219 = vset.pattern.permute.xlu0 1
    %220 = vperm.xlu0 %219, %v38
    %v221 = vpop.permute.xlu0 %220
    %v223 = vlaneseq
    %v224 = vshrl.u32 %v223, 7
    %v225 = vsub.s32 1, %v224
    %v226 = vrot.slane %v39, %v225
    %v227 = vsub.f32 %v161, %v226
    %v228 = vsub.f32 %v165, %v226
    %v229 = vsub.f32 %v169, %v226
    %v230 = vsub.f32 %v173, %v226
    %v231 = vsub.f32 %v177, %v226
    %v232 = vsub.f32 %v181, %v226
    %v233 = vsub.f32 %v185, %v226
    %v234 = vsub.f32 %v189, %v226
    %v235 = vsub.f32 %v193, %v226
    %v236 = vsub.f32 %v197, %v226
    %v237 = vsub.f32 %v201, %v226
    %v238 = vsub.f32 %v205, %v226
    %v239 = vsub.f32 %v209, %v226
    %v240 = vsub.f32 %v213, %v226
    %v241 = vsub.f32 %v217, %v226
    %v242 = vsub.f32 %v221, %v226
    %v243 = vmul.f32 %v227, %v227
    %v244 = vmul.f32 %v228, %v228
    %v245 = vmul.f32 %v229, %v229
    %v246 = vmul.f32 %v230, %v230
    %v247 = vmul.f32 %v231, %v231
    %v248 = vmul.f32 %v232, %v232
    %v249 = vmul.f32 %v233, %v233
    %v250 = vmul.f32 %v234, %v234
    %v251 = vmul.f32 %v235, %v235
    %v252 = vmul.f32 %v236, %v236
    %v253 = vmul.f32 %v237, %v237
    %v254 = vmul.f32 %v238, %v238
    %v255 = vmul.f32 %v239, %v239
    %v256 = vmul.f32 %v240, %v240
    %v257 = vmul.f32 %v241, %v241
    %v258 = vmul.f32 %v242, %v242
    %v259 = vadd.f32 %v143, %v243
    %v260 = vadd.f32 %v144, %v244
    %v261 = vadd.f32 %v145, %v245
    %v262 = vadd.f32 %v146, %v246
    %v263 = vadd.f32 %v147, %v247
    %v264 = vadd.f32 %v148, %v248
    %v265 = vadd.f32 %v149, %v249
    %v266 = vadd.f32 %v150, %v250
    %v267 = vadd.f32 %v151, %v251
    %v268 = vadd.f32 %v152, %v252
    %v269 = vadd.f32 %v153, %v253
    %v270 = vadd.f32 %v154, %v254
    %v271 = vadd.f32 %v155, %v255
    %v272 = vadd.f32 %v156, %v256
    %v273 = vadd.f32 %v157, %v257
    %v274 = vadd.f32 %v158, %v258
    %275 = vset.pattern.permute.xlu0 2
    %276 = vperm.xlu0 %275, %v23
    %v277 = vpop.permute.xlu0 %276
    %279 = vset.pattern.permute.xlu0 2
    %280 = vperm.xlu0 %279, %v24
    %v281 = vpop.permute.xlu0 %280
    %283 = vset.pattern.permute.xlu0 2
    %284 = vperm.xlu0 %283, %v25
    %v285 = vpop.permute.xlu0 %284
    %287 = vset.pattern.permute.xlu0 2
    %288 = vperm.xlu0 %287, %v26
    %v289 = vpop.permute.xlu0 %288
    %291 = vset.pattern.permute.xlu0 2
    %292 = vperm.xlu0 %291, %v27
    %v293 = vpop.permute.xlu0 %292
    %295 = vset.pattern.permute.xlu0 2
    %296 = vperm.xlu0 %295, %v28
    %v297 = vpop.permute.xlu0 %296
    %299 = vset.pattern.permute.xlu0 2
    %300 = vperm.xlu0 %299, %v29
    %v301 = vpop.permute.xlu0 %300
    %303 = vset.pattern.permute.xlu0 2
    %304 = vperm.xlu0 %303, %v30
    %v305 = vpop.permute.xlu0 %304
    %307 = vset.pattern.permute.xlu0 2
    %308 = vperm.xlu0 %307, %v31
    %v309 = vpop.permute.xlu0 %308
    %311 = vset.pattern.permute.xlu0 2
    %312 = vperm.xlu0 %311, %v32
    %v313 = vpop.permute.xlu0 %312
    %315 = vset.pattern.permute.xlu0 2
    %316 = vperm.xlu0 %315, %v33
    %v317 = vpop.permute.xlu0 %316
    %319 = vset.pattern.permute.xlu0 2
    %320 = vperm.xlu0 %319, %v34
    %v321 = vpop.permute.xlu0 %320
    %323 = vset.pattern.permute.xlu0 2
    %324 = vperm.xlu0 %323, %v35
    %v325 = vpop.permute.xlu0 %324
    %327 = vset.pattern.permute.xlu0 2
    %328 = vperm.xlu0 %327, %v36
    %v329 = vpop.permute.xlu0 %328
    %331 = vset.pattern.permute.xlu0 2
    %332 = vperm.xlu0 %331, %v37
    %v333 = vpop.permute.xlu0 %332
    %335 = vset.pattern.permute.xlu0 2
    %336 = vperm.xlu0 %335, %v38
    %v337 = vpop.permute.xlu0 %336
    %v339 = vlaneseq
    %v340 = vshrl.u32 %v339, 7
    %v341 = vsub.s32 2, %v340
    %v342 = vrot.slane %v39, %v341
    %v343 = vsub.f32 %v277, %v342
    %v344 = vsub.f32 %v281, %v342
    %v345 = vsub.f32 %v285, %v342
    %v346 = vsub.f32 %v289, %v342
    %v347 = vsub.f32 %v293, %v342
    %v348 = vsub.f32 %v297, %v342
    %v349 = vsub.f32 %v301, %v342
    %v350 = vsub.f32 %v305, %v342
    %v351 = vsub.f32 %v309, %v342
    %v352 = vsub.f32 %v313, %v342
    %v353 = vsub.f32 %v317, %v342
    %v354 = vsub.f32 %v321, %v342
    %v355 = vsub.f32 %v325, %v342
    %v356 = vsub.f32 %v329, %v342
    %v357 = vsub.f32 %v333, %v342
    %v358 = vsub.f32 %v337, %v342
    %v359 = vmul.f32 %v343, %v343
    %v360 = vmul.f32 %v344, %v344
    %v361 = vmul.f32 %v345, %v345
    %v362 = vmul.f32 %v346, %v346
    %v363 = vmul.f32 %v347, %v347
    %v364 = vmul.f32 %v348, %v348
    %v365 = vmul.f32 %v349, %v349
    %v366 = vmul.f32 %v350, %v350
    %v367 = vmul.f32 %v351, %v351
    %v368 = vmul.f32 %v352, %v352
    %v369 = vmul.f32 %v353, %v353
    %v370 = vmul.f32 %v354, %v354
    %v371 = vmul.f32 %v355, %v355
    %v372 = vmul.f32 %v356, %v356
    %v373 = vmul.f32 %v357, %v357
    %v374 = vmul.f32 %v358, %v358
    %v375 = vadd.f32 %v259, %v359
    %v376 = vadd.f32 %v260, %v360
    %v377 = vadd.f32 %v261, %v361
    %v378 = vadd.f32 %v262, %v362
    %v379 = vadd.f32 %v263, %v363
    %v380 = vadd.f32 %v264, %v364
    %v381 = vadd.f32 %v265, %v365
    %v382 = vadd.f32 %v266, %v366
    %v383 = vadd.f32 %v267, %v367
    %v384 = vadd.f32 %v268, %v368
    %v385 = vadd.f32 %v269, %v369
    %v386 = vadd.f32 %v270, %v370
    %v387 = vadd.f32 %v271, %v371
    %v388 = vadd.f32 %v272, %v372
    %v389 = vadd.f32 %v273, %v373
    %v390 = vadd.f32 %v274, %v374
    %391 = vset.pattern.permute.xlu0 3
    %392 = vperm.xlu0 %391, %v23
    %v393 = vpop.permute.xlu0 %392
    %395 = vset.pattern.permute.xlu0 3
    %396 = vperm.xlu0 %395, %v24
    %v397 = vpop.permute.xlu0 %396
    %399 = vset.pattern.permute.xlu0 3
    %400 = vperm.xlu0 %399, %v25
    %v401 = vpop.permute.xlu0 %400
    %403 = vset.pattern.permute.xlu0 3
    %404 = vperm.xlu0 %403, %v26
    %v405 = vpop.permute.xlu0 %404
    %407 = vset.pattern.permute.xlu0 3
    %408 = vperm.xlu0 %407, %v27
    %v409 = vpop.permute.xlu0 %408
    %411 = vset.pattern.permute.xlu0 3
    %412 = vperm.xlu0 %411, %v28
    %v413 = vpop.permute.xlu0 %412
    %415 = vset.pattern.permute.xlu0 3
    %416 = vperm.xlu0 %415, %v29
    %v417 = vpop.permute.xlu0 %416
    %419 = vset.pattern.permute.xlu0 3
    %420 = vperm.xlu0 %419, %v30
    %v421 = vpop.permute.xlu0 %420
    %423 = vset.pattern.permute.xlu0 3
    %424 = vperm.xlu0 %423, %v31
    %v425 = vpop.permute.xlu0 %424
    %427 = vset.pattern.permute.xlu0 3
    %428 = vperm.xlu0 %427, %v32
    %v429 = vpop.permute.xlu0 %428
    %431 = vset.pattern.permute.xlu0 3
    %432 = vperm.xlu0 %431, %v33
    %v433 = vpop.permute.xlu0 %432
    %435 = vset.pattern.permute.xlu0 3
    %436 = vperm.xlu0 %435, %v34
    %v437 = vpop.permute.xlu0 %436
    %439 = vset.pattern.permute.xlu0 3
    %440 = vperm.xlu0 %439, %v35
    %v441 = vpop.permute.xlu0 %440
    %443 = vset.pattern.permute.xlu0 3
    %444 = vperm.xlu0 %443, %v36
    %v445 = vpop.permute.xlu0 %444
    %447 = vset.pattern.permute.xlu0 3
    %448 = vperm.xlu0 %447, %v37
    %v449 = vpop.permute.xlu0 %448
    %451 = vset.pattern.permute.xlu0 3
    %452 = vperm.xlu0 %451, %v38
    %v453 = vpop.permute.xlu0 %452
    %v455 = vlaneseq
    %v456 = vshrl.u32 %v455, 7
    %v457 = vsub.s32 3, %v456
    %v458 = vrot.slane %v39, %v457
    %v459 = vsub.f32 %v393, %v458
    %v460 = vsub.f32 %v397, %v458
    %v461 = vsub.f32 %v401, %v458
    %v462 = vsub.f32 %v405, %v458
    %v463 = vsub.f32 %v409, %v458
    %v464 = vsub.f32 %v413, %v458
    %v465 = vsub.f32 %v417, %v458
    %v466 = vsub.f32 %v421, %v458
    %v467 = vsub.f32 %v425, %v458
    %v468 = vsub.f32 %v429, %v458
    %v469 = vsub.f32 %v433, %v458
    %v470 = vsub.f32 %v437, %v458
    %v471 = vsub.f32 %v441, %v458
    %v472 = vsub.f32 %v445, %v458
    %v473 = vsub.f32 %v449, %v458
    %v474 = vsub.f32 %v453, %v458
    %v475 = vmul.f32 %v459, %v459
    %v476 = vmul.f32 %v460, %v460
    %v477 = vmul.f32 %v461, %v461
    %v478 = vmul.f32 %v462, %v462
    %v479 = vmul.f32 %v463, %v463
    %v480 = vmul.f32 %v464, %v464
    %v481 = vmul.f32 %v465, %v465
    %v482 = vmul.f32 %v466, %v466
    %v483 = vmul.f32 %v467, %v467
    %v484 = vmul.f32 %v468, %v468
    %v485 = vmul.f32 %v469, %v469
    %v486 = vmul.f32 %v470, %v470
    %v487 = vmul.f32 %v471, %v471
    %v488 = vmul.f32 %v472, %v472
    %v489 = vmul.f32 %v473, %v473
    %v490 = vmul.f32 %v474, %v474
    %v491 = vadd.f32 %v375, %v475
    %v492 = vadd.f32 %v376, %v476
    %v493 = vadd.f32 %v377, %v477
    %v494 = vadd.f32 %v378, %v478
    %v495 = vadd.f32 %v379, %v479
    %v496 = vadd.f32 %v380, %v480
    %v497 = vadd.f32 %v381, %v481
    %v498 = vadd.f32 %v382, %v482
    %v499 = vadd.f32 %v383, %v483
    %v500 = vadd.f32 %v384, %v484
    %v501 = vadd.f32 %v385, %v485
    %v502 = vadd.f32 %v386, %v486
    %v503 = vadd.f32 %v387, %v487
    %v504 = vadd.f32 %v388, %v488
    %v505 = vadd.f32 %v389, %v489
    %v506 = vadd.f32 %v390, %v490
    %v507 = vsub.f32 %v143, %v491
    %v508 = vsub.f32 %v144, %v492
    %v509 = vsub.f32 %v145, %v493
    %v510 = vsub.f32 %v146, %v494
    %v511 = vsub.f32 %v147, %v495
    %v512 = vsub.f32 %v148, %v496
    %v513 = vsub.f32 %v149, %v497
    %v514 = vsub.f32 %v150, %v498
    %v515 = vsub.f32 %v151, %v499
    %v516 = vsub.f32 %v152, %v500
    %v517 = vsub.f32 %v153, %v501
    %v518 = vsub.f32 %v154, %v502
    %v519 = vsub.f32 %v155, %v503
    %v520 = vsub.f32 %v156, %v504
    %v521 = vsub.f32 %v157, %v505
    %v522 = vsub.f32 %v158, %v506
    %v523 = vmul.f32 %v507, 1.442695
    %v524 = vpow.pop %v523
    %v525 = vmul.f32 %v508, 1.442695
    %v526 = vpow.pop %v525
    %v527 = vmul.f32 %v509, 1.442695
    %v528 = vpow.pop %v527
    %v529 = vmul.f32 %v510, 1.442695
    %v530 = vpow.pop %v529
    %v531 = vmul.f32 %v511, 1.442695
    %v532 = vpow.pop %v531
    %v533 = vmul.f32 %v512, 1.442695
    %v534 = vpow.pop %v533
    %v535 = vmul.f32 %v513, 1.442695
    %v536 = vpow.pop %v535
    %v537 = vmul.f32 %v514, 1.442695
    %v538 = vpow.pop %v537
    %v539 = vmul.f32 %v515, 1.442695
    %v540 = vpow.pop %v539
    %v541 = vmul.f32 %v516, 1.442695
    %v542 = vpow.pop %v541
    %v543 = vmul.f32 %v517, 1.442695
    %v544 = vpow.pop %v543
    %v545 = vmul.f32 %v518, 1.442695
    %v546 = vpow.pop %v545
    %v547 = vmul.f32 %v519, 1.442695
    %v548 = vpow.pop %v547
    %v549 = vmul.f32 %v520, 1.442695
    %v550 = vpow.pop %v549
    %v551 = vmul.f32 %v521, 1.442695
    %v552 = vpow.pop %v551
    %v553 = vmul.f32 %v522, 1.442695
    %v554 = vpow.pop %v553
    %v555 = vlaneseq
    %v556 = vshrl.u32 %v555, 7
    %v557 = vsub.s32 1, %v556
    %v558 = vrot.slane %v41, %v557
    %v559 = vmul.f32 %v558, %v227
    %v560 = vmul.f32 %v558, %v228
    %v561 = vmul.f32 %v558, %v229
    %v562 = vmul.f32 %v558, %v230
    %v563 = vmul.f32 %v558, %v231
    %v564 = vmul.f32 %v558, %v232
    %v565 = vmul.f32 %v558, %v233
    %v566 = vmul.f32 %v558, %v234
    %v567 = vmul.f32 %v558, %v235
    %v568 = vmul.f32 %v558, %v236
    %v569 = vmul.f32 %v558, %v237
    %v570 = vmul.f32 %v558, %v238
    %v571 = vmul.f32 %v558, %v239
    %v572 = vmul.f32 %v558, %v240
    %v573 = vmul.f32 %v558, %v241
    %v574 = vmul.f32 %v558, %v242
    %v575 = vlaneseq
    %v576 = vshrl.u32 %v575, 7
    %v577 = vsub.s32 2, %v576
    %v578 = vrot.slane %v41, %v577
    %v579 = vmul.f32 %v578, %v343
    %v580 = vmul.f32 %v578, %v344
    %v581 = vmul.f32 %v578, %v345
    %v582 = vmul.f32 %v578, %v346
    %v583 = vmul.f32 %v578, %v347
    %v584 = vmul.f32 %v578, %v348
    %v585 = vmul.f32 %v578, %v349
    %v586 = vmul.f32 %v578, %v350
    %v587 = vmul.f32 %v578, %v351
    %v588 = vmul.f32 %v578, %v352
    %v589 = vmul.f32 %v578, %v353
    %v590 = vmul.f32 %v578, %v354
    %v591 = vmul.f32 %v578, %v355
    %v592 = vmul.f32 %v578, %v356
    %v593 = vmul.f32 %v578, %v357
    %v594 = vmul.f32 %v578, %v358
    %v595 = vadd.f32 %v559, %v579
    %v596 = vadd.f32 %v560, %v580
    %v597 = vadd.f32 %v561, %v581
    %v598 = vadd.f32 %v562, %v582
    %v599 = vadd.f32 %v563, %v583
    %v600 = vadd.f32 %v564, %v584
    %v601 = vadd.f32 %v565, %v585
    %v602 = vadd.f32 %v566, %v586
    %v603 = vadd.f32 %v567, %v587
    %v604 = vadd.f32 %v568, %v588
    %v605 = vadd.f32 %v569, %v589
    %v606 = vadd.f32 %v570, %v590
    %v607 = vadd.f32 %v571, %v591
    %v608 = vadd.f32 %v572, %v592
    %v609 = vadd.f32 %v573, %v593
    %v610 = vadd.f32 %v574, %v594
    %v611 = vlaneseq
    %v612 = vshrl.u32 %v611, 7
    %v613 = vsub.s32 3, %v612
    %v614 = vrot.slane %v41, %v613
    %v615 = vmul.f32 %v614, %v459
    %v616 = vmul.f32 %v614, %v460
    %v617 = vmul.f32 %v614, %v461
    %v618 = vmul.f32 %v614, %v462
    %v619 = vmul.f32 %v614, %v463
    %v620 = vmul.f32 %v614, %v464
    %v621 = vmul.f32 %v614, %v465
    %v622 = vmul.f32 %v614, %v466
    %v623 = vmul.f32 %v614, %v467
    %v624 = vmul.f32 %v614, %v468
    %v625 = vmul.f32 %v614, %v469
    %v626 = vmul.f32 %v614, %v470
    %v627 = vmul.f32 %v614, %v471
    %v628 = vmul.f32 %v614, %v472
    %v629 = vmul.f32 %v614, %v473
    %v630 = vmul.f32 %v614, %v474
    %v631 = vadd.f32 %v595, %v615
    %v632 = vadd.f32 %v596, %v616
    %v633 = vadd.f32 %v597, %v617
    %v634 = vadd.f32 %v598, %v618
    %v635 = vadd.f32 %v599, %v619
    %v636 = vadd.f32 %v600, %v620
    %v637 = vadd.f32 %v601, %v621
    %v638 = vadd.f32 %v602, %v622
    %v639 = vadd.f32 %v603, %v623
    %v640 = vadd.f32 %v604, %v624
    %v641 = vadd.f32 %v605, %v625
    %v642 = vadd.f32 %v606, %v626
    %v643 = vadd.f32 %v607, %v627
    %v644 = vadd.f32 %v608, %v628
    %v645 = vadd.f32 %v609, %v629
    %v646 = vadd.f32 %v610, %v630
    %v647 = vlaneseq
    %v648 = vshrl.u32 %v647, 7
    %v649 = vsub.s32 0, %v648
    %v650 = vrot.slane %v40, %v649
    %v651 = vadd.f32 %v650, %v631
    %v652 = vadd.f32 %v650, %v632
    %v653 = vadd.f32 %v650, %v633
    %v654 = vadd.f32 %v650, %v634
    %v655 = vadd.f32 %v650, %v635
    %v656 = vadd.f32 %v650, %v636
    %v657 = vadd.f32 %v650, %v637
    %v658 = vadd.f32 %v650, %v638
    %v659 = vadd.f32 %v650, %v639
    %v660 = vadd.f32 %v650, %v640
    %v661 = vadd.f32 %v650, %v641
    %v662 = vadd.f32 %v650, %v642
    %v663 = vadd.f32 %v650, %v643
    %v664 = vadd.f32 %v650, %v644
    %v665 = vadd.f32 %v650, %v645
    %v666 = vadd.f32 %v650, %v646
    %v667 = vmul.f32 %v524, %v651
    %v668 = vmul.f32 %v526, %v652
    %v669 = vmul.f32 %v528, %v653
    %v670 = vmul.f32 %v530, %v654
    %v671 = vmul.f32 %v532, %v655
    %v672 = vmul.f32 %v534, %v656
    %v673 = vmul.f32 %v536, %v657
    %v674 = vmul.f32 %v538, %v658
    %v675 = vmul.f32 %v540, %v659
    %v676 = vmul.f32 %v542, %v660
    %v677 = vmul.f32 %v544, %v661
    %v678 = vmul.f32 %v546, %v662
    %v679 = vmul.f32 %v548, %v663
    %v680 = vmul.f32 %v550, %v664
    %v681 = vmul.f32 %v552, %v665
    %v682 = vmul.f32 %v554, %v666
    %683 = vadd.xlane.f32.xlu0 %v667
    %v684 = vpop.xlane.xlu0 %683
    %685 = vadd.xlane.f32.xlu0 %v668
    %v686 = vpop.xlane.xlu0 %685
    %687 = vadd.xlane.f32.xlu0 %v669
    %v688 = vpop.xlane.xlu0 %687
    %689 = vadd.xlane.f32.xlu0 %v670
    %v690 = vpop.xlane.xlu0 %689
    %691 = vadd.xlane.f32.xlu0 %v671
    %v692 = vpop.xlane.xlu0 %691
    %693 = vadd.xlane.f32.xlu0 %v672
    %v694 = vpop.xlane.xlu0 %693
    %695 = vadd.xlane.f32.xlu0 %v673
    %v696 = vpop.xlane.xlu0 %695
    %697 = vadd.xlane.f32.xlu0 %v674
    %v698 = vpop.xlane.xlu0 %697
    %699 = vadd.xlane.f32.xlu0 %v675
    %v700 = vpop.xlane.xlu0 %699
    %701 = vadd.xlane.f32.xlu0 %v676
    %v702 = vpop.xlane.xlu0 %701
    %703 = vadd.xlane.f32.xlu0 %v677
    %v704 = vpop.xlane.xlu0 %703
    %705 = vadd.xlane.f32.xlu0 %v678
    %v706 = vpop.xlane.xlu0 %705
    %707 = vadd.xlane.f32.xlu0 %v679
    %v708 = vpop.xlane.xlu0 %707
    %709 = vadd.xlane.f32.xlu0 %v680
    %v710 = vpop.xlane.xlu0 %709
    %711 = vadd.xlane.f32.xlu0 %v681
    %v712 = vpop.xlane.xlu0 %711
    %713 = vadd.xlane.f32.xlu0 %v682
    %v714 = vpop.xlane.xlu0 %713
    %v715 = vld [vmem:[#allocation2] sm:$0x1]
    %v732 = vlaneseq
    %v733 = vand.u32 %v732, 127
    %v734 = vlaneseq
    %v735 = vshrl.u32 %v734, 7
    %v736 = vsub.s32 %v733, %v735
    %v737 = vrot.slane %v684, %v736
    %v738 = vadd.s32 %v733, 4294967288
    %v739 = vlaneseq
    %v740 = vshrl.u32 %v739, 7
    %v741 = vsub.s32 %v738, %v740
    %v742 = vrot.slane %v686, %v741
    %vm743 = vcmask 130112
    %v744 = vsel %vm743, %v742, %v737
    %v745 = vadd.s32 %v733, 4294967280
    %v746 = vlaneseq
    %v747 = vshrl.u32 %v746, 7
    %v748 = vsub.s32 %v745, %v747
    %v749 = vrot.slane %v688, %v748
    %vm750 = vcmask 195712
    %v751 = vsel %vm750, %v749, %v744
    %v752 = vadd.s32 %v733, 4294967272
    %v753 = vlaneseq
    %v754 = vshrl.u32 %v753, 7
    %v755 = vsub.s32 %v752, %v754
    %v756 = vrot.slane %v690, %v755
    %vm757 = vcmask 261312
    %v758 = vsel %vm757, %v756, %v751
    %v759 = vadd.s32 %v733, 4294967264
    %v760 = vlaneseq
    %v761 = vshrl.u32 %v760, 7
    %v762 = vsub.s32 %v759, %v761
    %v763 = vrot.slane %v692, %v762
    %vm764 = vcmask 326912
    %v765 = vsel %vm764, %v763, %v758
    %v766 = vadd.s32 %v733, 4294967256
    %v767 = vlaneseq
    %v768 = vshrl.u32 %v767, 7
    %v769 = vsub.s32 %v766, %v768
    %v770 = vrot.slane %v694, %v769
    %vm771 = vcmask 392512
    %v772 = vsel %vm771, %v770, %v765
    %v773 = vadd.s32 %v733, 4294967248
    %v774 = vlaneseq
    %v775 = vshrl.u32 %v774, 7
    %v776 = vsub.s32 %v773, %v775
    %v777 = vrot.slane %v696, %v776
    %vm778 = vcmask 458112
    %v779 = vsel %vm778, %v777, %v772
    %v780 = vadd.s32 %v733, 4294967240
    %v781 = vlaneseq
    %v782 = vshrl.u32 %v781, 7
    %v783 = vsub.s32 %v780, %v782
    %v784 = vrot.slane %v698, %v783
    %vm785 = vcmask 523712
    %v786 = vsel %vm785, %v784, %v779
    %v787 = vadd.s32 %v733, 4294967232
    %v788 = vlaneseq
    %v789 = vshrl.u32 %v788, 7
    %v790 = vsub.s32 %v787, %v789
    %v791 = vrot.slane %v700, %v790
    %vm792 = vcmask 589312
    %v793 = vsel %vm792, %v791, %v786
    %v794 = vadd.s32 %v733, 4294967224
    %v795 = vlaneseq
    %v796 = vshrl.u32 %v795, 7
    %v797 = vsub.s32 %v794, %v796
    %v798 = vrot.slane %v702, %v797
    %vm799 = vcmask 654912
    %v800 = vsel %vm799, %v798, %v793
    %v801 = vadd.s32 %v733, 4294967216
    %v802 = vlaneseq
    %v803 = vshrl.u32 %v802, 7
    %v804 = vsub.s32 %v801, %v803
    %v805 = vrot.slane %v704, %v804
    %vm806 = vcmask 720512
    %v807 = vsel %vm806, %v805, %v800
    %v808 = vadd.s32 %v733, 4294967208
    %v809 = vlaneseq
    %v810 = vshrl.u32 %v809, 7
    %v811 = vsub.s32 %v808, %v810
    %v812 = vrot.slane %v706, %v811
    %vm813 = vcmask 786112
    %v814 = vsel %vm813, %v812, %v807
    %v815 = vadd.s32 %v733, 4294967200
    %v816 = vlaneseq
    %v817 = vshrl.u32 %v816, 7
    %v818 = vsub.s32 %v815, %v817
    %v819 = vrot.slane %v708, %v818
    %vm820 = vcmask 851712
    %v821 = vsel %vm820, %v819, %v814
    %v822 = vadd.s32 %v733, 4294967192
    %v823 = vlaneseq
    %v824 = vshrl.u32 %v823, 7
    %v825 = vsub.s32 %v822, %v824
    %v826 = vrot.slane %v710, %v825
    %vm827 = vcmask 917312
    %v828 = vsel %vm827, %v826, %v821
    %v829 = vadd.s32 %v733, 4294967184
    %v830 = vlaneseq
    %v831 = vshrl.u32 %v830, 7
    %v832 = vsub.s32 %v829, %v831
    %v833 = vrot.slane %v712, %v832
    %vm834 = vcmask 982912
    %v835 = vsel %vm834, %v833, %v828
    %v836 = vadd.s32 %v733, 4294967176
    %v837 = vlaneseq
    %v838 = vshrl.u32 %v837, 7
    %v839 = vsub.s32 %v836, %v838
    %v840 = vrot.slane %v714, %v839
    %vm841 = vcmask 1048512
    %v842 = vsel %vm841, %v840, %v835
    %v844 = vadd.f32 %v715, %v842
    %845 = vst [vmem:[#allocation2] sm:$0x1] %v844
    %v846 = vsub.f32 %v243, %v491
    %v847 = vsub.f32 %v244, %v492
    %v848 = vsub.f32 %v245, %v493
    %v849 = vsub.f32 %v246, %v494
    %v850 = vsub.f32 %v247, %v495
    %v851 = vsub.f32 %v248, %v496
    %v852 = vsub.f32 %v249, %v497
    %v853 = vsub.f32 %v250, %v498
    %v854 = vsub.f32 %v251, %v499
    %v855 = vsub.f32 %v252, %v500
    %v856 = vsub.f32 %v253, %v501
    %v857 = vsub.f32 %v254, %v502
    %v858 = vsub.f32 %v255, %v503
    %v859 = vsub.f32 %v256, %v504
    %v860 = vsub.f32 %v257, %v505
    %v861 = vsub.f32 %v258, %v506
    %v862 = vmul.f32 %v846, 1.442695
    %v863 = vpow.pop %v862
    %v864 = vmul.f32 %v847, 1.442695
    %v865 = vpow.pop %v864
    %v866 = vmul.f32 %v848, 1.442695
    %v867 = vpow.pop %v866
    %v868 = vmul.f32 %v849, 1.442695
    %v869 = vpow.pop %v868
    %v870 = vmul.f32 %v850, 1.442695
    %v871 = vpow.pop %v870
    %v872 = vmul.f32 %v851, 1.442695
    %v873 = vpow.pop %v872
    %v874 = vmul.f32 %v852, 1.442695
    %v875 = vpow.pop %v874
    %v876 = vmul.f32 %v853, 1.442695
    %v877 = vpow.pop %v876
    %v878 = vmul.f32 %v854, 1.442695
    %v879 = vpow.pop %v878
    %v880 = vmul.f32 %v855, 1.442695
    %v881 = vpow.pop %v880
    %v882 = vmul.f32 %v856, 1.442695
    %v883 = vpow.pop %v882
    %v884 = vmul.f32 %v857, 1.442695
    %v885 = vpow.pop %v884
    %v886 = vmul.f32 %v858, 1.442695
    %v887 = vpow.pop %v886
    %v888 = vmul.f32 %v859, 1.442695
    %v889 = vpow.pop %v888
    %v890 = vmul.f32 %v860, 1.442695
    %v891 = vpow.pop %v890
    %v892 = vmul.f32 %v861, 1.442695
    %v893 = vpow.pop %v892
    %v894 = vlaneseq
    %v895 = vshrl.u32 %v894, 7
    %v896 = vsub.s32 4, %v895
    %v897 = vrot.slane %v41, %v896
    %v898 = vmul.f32 %v897, %v127
    %v899 = vmul.f32 %v897, %v128
    %v900 = vmul.f32 %v897, %v129
    %v901 = vmul.f32 %v897, %v130
    %v902 = vmul.f32 %v897, %v131
    %v903 = vmul.f32 %v897, %v132
    %v904 = vmul.f32 %v897, %v133
    %v905 = vmul.f32 %v897, %v134
    %v906 = vmul.f32 %v897, %v135
    %v907 = vmul.f32 %v897, %v136
    %v908 = vmul.f32 %v897, %v137
    %v909 = vmul.f32 %v897, %v138
    %v910 = vmul.f32 %v897, %v139
    %v911 = vmul.f32 %v897, %v140
    %v912 = vmul.f32 %v897, %v141
    %v913 = vmul.f32 %v897, %v142
    %v914 = vlaneseq
    %v915 = vshrl.u32 %v914, 7
    %v916 = vsub.s32 6, %v915
    %v917 = vrot.slane %v41, %v916
    %v918 = vmul.f32 %v917, %v343
    %v919 = vmul.f32 %v917, %v344
    %v920 = vmul.f32 %v917, %v345
    %v921 = vmul.f32 %v917, %v346
    %v922 = vmul.f32 %v917, %v347
    %v923 = vmul.f32 %v917, %v348
    %v924 = vmul.f32 %v917, %v349
    %v925 = vmul.f32 %v917, %v350
    %v926 = vmul.f32 %v917, %v351
    %v927 = vmul.f32 %v917, %v352
    %v928 = vmul.f32 %v917, %v353
    %v929 = vmul.f32 %v917, %v354
    %v930 = vmul.f32 %v917, %v355
    %v931 = vmul.f32 %v917, %v356
    %v932 = vmul.f32 %v917, %v357
    %v933 = vmul.f32 %v917, %v358
    %v934 = vadd.f32 %v898, %v918
    %v935 = vadd.f32 %v899, %v919
    %v936 = vadd.f32 %v900, %v920
    %v937 = vadd.f32 %v901, %v921
    %v938 = vadd.f32 %v902, %v922
    %v939 = vadd.f32 %v903, %v923
    %v940 = vadd.f32 %v904, %v924
    %v941 = vadd.f32 %v905, %v925
    %v942 = vadd.f32 %v906, %v926
    %v943 = vadd.f32 %v907, %v927
    %v944 = vadd.f32 %v908, %v928
    %v945 = vadd.f32 %v909, %v929
    %v946 = vadd.f32 %v910, %v930
    %v947 = vadd.f32 %v911, %v931
    %v948 = vadd.f32 %v912, %v932
    %v949 = vadd.f32 %v913, %v933
    %v950 = vlaneseq
    %v951 = vshrl.u32 %v950, 7
    %v952 = vsub.s32 7, %v951
    %v953 = vrot.slane %v41, %v952
    %v954 = vmul.f32 %v953, %v459
    %v955 = vmul.f32 %v953, %v460
    %v956 = vmul.f32 %v953, %v461
    %v957 = vmul.f32 %v953, %v462
    %v958 = vmul.f32 %v953, %v463
    %v959 = vmul.f32 %v953, %v464
    %v960 = vmul.f32 %v953, %v465
    %v961 = vmul.f32 %v953, %v466
    %v962 = vmul.f32 %v953, %v467
    %v963 = vmul.f32 %v953, %v468
    %v964 = vmul.f32 %v953, %v469
    %v965 = vmul.f32 %v953, %v470
    %v966 = vmul.f32 %v953, %v471
    %v967 = vmul.f32 %v953, %v472
    %v968 = vmul.f32 %v953, %v473
    %v969 = vmul.f32 %v953, %v474
    %v970 = vadd.f32 %v934, %v954
    %v971 = vadd.f32 %v935, %v955
    %v972 = vadd.f32 %v936, %v956
    %v973 = vadd.f32 %v937, %v957
    %v974 = vadd.f32 %v938, %v958
    %v975 = vadd.f32 %v939, %v959
    %v976 = vadd.f32 %v940, %v960
    %v977 = vadd.f32 %v941, %v961
    %v978 = vadd.f32 %v942, %v962
    %v979 = vadd.f32 %v943, %v963
    %v980 = vadd.f32 %v944, %v964
    %v981 = vadd.f32 %v945, %v965
    %v982 = vadd.f32 %v946, %v966
    %v983 = vadd.f32 %v947, %v967
    %v984 = vadd.f32 %v948, %v968
    %v985 = vadd.f32 %v949, %v969
    %v986 = vlaneseq
    %v987 = vshrl.u32 %v986, 7
    %v988 = vsub.s32 1, %v987
    %v989 = vrot.slane %v40, %v988
    %v990 = vadd.f32 %v989, %v970
    %v991 = vadd.f32 %v989, %v971
    %v992 = vadd.f32 %v989, %v972
    %v993 = vadd.f32 %v989, %v973
    %v994 = vadd.f32 %v989, %v974
    %v995 = vadd.f32 %v989, %v975
    %v996 = vadd.f32 %v989, %v976
    %v997 = vadd.f32 %v989, %v977
    %v998 = vadd.f32 %v989, %v978
    %v999 = vadd.f32 %v989, %v979
    %v1000 = vadd.f32 %v989, %v980
    %v1001 = vadd.f32 %v989, %v981
    %v1002 = vadd.f32 %v989, %v982
    %v1003 = vadd.f32 %v989, %v983
    %v1004 = vadd.f32 %v989, %v984
    %v1005 = vadd.f32 %v989, %v985
    %v1006 = vmul.f32 %v863, %v990
    %v1007 = vmul.f32 %v865, %v991
    %v1008 = vmul.f32 %v867, %v992
    %v1009 = vmul.f32 %v869, %v993
    %v1010 = vmul.f32 %v871, %v994
    %v1011 = vmul.f32 %v873, %v995
    %v1012 = vmul.f32 %v875, %v996
    %v1013 = vmul.f32 %v877, %v997
    %v1014 = vmul.f32 %v879, %v998
    %v1015 = vmul.f32 %v881, %v999
    %v1016 = vmul.f32 %v883, %v1000
    %v1017 = vmul.f32 %v885, %v1001
    %v1018 = vmul.f32 %v887, %v1002
    %v1019 = vmul.f32 %v889, %v1003
    %v1020 = vmul.f32 %v891, %v1004
    %v1021 = vmul.f32 %v893, %v1005
    %1022 = vadd.xlane.f32.xlu0 %v1006
    %v1023 = vpop.xlane.xlu0 %1022
    %1024 = vadd.xlane.f32.xlu0 %v1007
    %v1025 = vpop.xlane.xlu0 %1024
    %1026 = vadd.xlane.f32.xlu0 %v1008
    %v1027 = vpop.xlane.xlu0 %1026
    %1028 = vadd.xlane.f32.xlu0 %v1009
    %v1029 = vpop.xlane.xlu0 %1028
    %1030 = vadd.xlane.f32.xlu0 %v1010
    %v1031 = vpop.xlane.xlu0 %1030
    %1032 = vadd.xlane.f32.xlu0 %v1011
    %v1033 = vpop.xlane.xlu0 %1032
    %1034 = vadd.xlane.f32.xlu0 %v1012
    %v1035 = vpop.xlane.xlu0 %1034
    %1036 = vadd.xlane.f32.xlu0 %v1013
    %v1037 = vpop.xlane.xlu0 %1036
    %1038 = vadd.xlane.f32.xlu0 %v1014
    %v1039 = vpop.xlane.xlu0 %1038
    %1040 = vadd.xlane.f32.xlu0 %v1015
    %v1041 = vpop.xlane.xlu0 %1040
    %1042 = vadd.xlane.f32.xlu0 %v1016
    %v1043 = vpop.xlane.xlu0 %1042
    %1044 = vadd.xlane.f32.xlu0 %v1017
    %v1045 = vpop.xlane.xlu0 %1044
    %1046 = vadd.xlane.f32.xlu0 %v1018
    %v1047 = vpop.xlane.xlu0 %1046
    %1048 = vadd.xlane.f32.xlu0 %v1019
    %v1049 = vpop.xlane.xlu0 %1048
    %1050 = vadd.xlane.f32.xlu0 %v1020
    %v1051 = vpop.xlane.xlu0 %1050
    %1052 = vadd.xlane.f32.xlu0 %v1021
    %v1053 = vpop.xlane.xlu0 %1052
    %v1054 = vld [vmem:[#allocation2 + $0x1] sm:$0x1]
    %v1071 = vlaneseq
    %v1072 = vshrl.u32 %v1071, 7
    %v1073 = vsub.s32 %v733, %v1072
    %v1074 = vrot.slane %v1023, %v1073
    %v1075 = vlaneseq
    %v1076 = vshrl.u32 %v1075, 7
    %v1077 = vsub.s32 %v738, %v1076
    %v1078 = vrot.slane %v1025, %v1077
    %v1079 = vsel %vm743, %v1078, %v1074
    %v1080 = vlaneseq
    %v1081 = vshrl.u32 %v1080, 7
    %v1082 = vsub.s32 %v745, %v1081
    %v1083 = vrot.slane %v1027, %v1082
    %v1084 = vsel %vm750, %v1083, %v1079
    %v1085 = vlaneseq
    %v1086 = vshrl.u32 %v1085, 7
    %v1087 = vsub.s32 %v752, %v1086
    %v1088 = vrot.slane %v1029, %v1087
    %v1089 = vsel %vm757, %v1088, %v1084
    %v1090 = vlaneseq
    %v1091 = vshrl.u32 %v1090, 7
    %v1092 = vsub.s32 %v759, %v1091
    %v1093 = vrot.slane %v1031, %v1092
    %v1094 = vsel %vm764, %v1093, %v1089
    %v1095 = vlaneseq
    %v1096 = vshrl.u32 %v1095, 7
    %v1097 = vsub.s32 %v766, %v1096
    %v1098 = vrot.slane %v1033, %v1097
    %v1099 = vsel %vm771, %v1098, %v1094
    %v1100 = vlaneseq
    %v1101 = vshrl.u32 %v1100, 7
    %v1102 = vsub.s32 %v773, %v1101
    %v1103 = vrot.slane %v1035, %v1102
    %v1104 = vsel %vm778, %v1103, %v1099
    %v1105 = vlaneseq
    %v1106 = vshrl.u32 %v1105, 7
    %v1107 = vsub.s32 %v780, %v1106
    %v1108 = vrot.slane %v1037, %v1107
    %v1109 = vsel %vm785, %v1108, %v1104
    %v1110 = vlaneseq
    %v1111 = vshrl.u32 %v1110, 7
    %v1112 = vsub.s32 %v787, %v1111
    %v1113 = vrot.slane %v1039, %v1112
    %v1114 = vsel %vm792, %v1113, %v1109
    %v1115 = vlaneseq
    %v1116 = vshrl.u32 %v1115, 7
    %v1117 = vsub.s32 %v794, %v1116
    %v1118 = vrot.slane %v1041, %v1117
    %v1119 = vsel %vm799, %v1118, %v1114
    %v1120 = vlaneseq
    %v1121 = vshrl.u32 %v1120, 7
    %v1122 = vsub.s32 %v801, %v1121
    %v1123 = vrot.slane %v1043, %v1122
    %v1124 = vsel %vm806, %v1123, %v1119
    %v1125 = vlaneseq
    %v1126 = vshrl.u32 %v1125, 7
    %v1127 = vsub.s32 %v808, %v1126
    %v1128 = vrot.slane %v1045, %v1127
    %v1129 = vsel %vm813, %v1128, %v1124
    %v1130 = vlaneseq
    %v1131 = vshrl.u32 %v1130, 7
    %v1132 = vsub.s32 %v815, %v1131
    %v1133 = vrot.slane %v1047, %v1132
    %v1134 = vsel %vm820, %v1133, %v1129
    %v1135 = vlaneseq
    %v1136 = vshrl.u32 %v1135, 7
    %v1137 = vsub.s32 %v822, %v1136
    %v1138 = vrot.slane %v1049, %v1137
    %v1139 = vsel %vm827, %v1138, %v1134
    %v1140 = vlaneseq
    %v1141 = vshrl.u32 %v1140, 7
    %v1142 = vsub.s32 %v829, %v1141
    %v1143 = vrot.slane %v1051, %v1142
    %v1144 = vsel %vm834, %v1143, %v1139
    %v1145 = vlaneseq
    %v1146 = vshrl.u32 %v1145, 7
    %v1147 = vsub.s32 %v836, %v1146
    %v1148 = vrot.slane %v1053, %v1147
    %v1149 = vsel %vm841, %v1148, %v1144
    %v1151 = vadd.f32 %v1054, %v1149
    %1152 = vst [vmem:[#allocation2 + $0x1] sm:$0x1] %v1151
    %v1153 = vsub.f32 %v359, %v491
    %v1154 = vsub.f32 %v360, %v492
    %v1155 = vsub.f32 %v361, %v493
    %v1156 = vsub.f32 %v362, %v494
    %v1157 = vsub.f32 %v363, %v495
    %v1158 = vsub.f32 %v364, %v496
    %v1159 = vsub.f32 %v365, %v497
    %v1160 = vsub.f32 %v366, %v498
    %v1161 = vsub.f32 %v367, %v499
    %v1162 = vsub.f32 %v368, %v500
    %v1163 = vsub.f32 %v369, %v501
    %v1164 = vsub.f32 %v370, %v502
    %v1165 = vsub.f32 %v371, %v503
    %v1166 = vsub.f32 %v372, %v504
    %v1167 = vsub.f32 %v373, %v505
    %v1168 = vsub.f32 %v374, %v506
    %v1169 = vmul.f32 %v1153, 1.442695
    %v1170 = vpow.pop %v1169
    %v1171 = vmul.f32 %v1154, 1.442695
    %v1172 = vpow.pop %v1171
    %v1173 = vmul.f32 %v1155, 1.442695
    %v1174 = vpow.pop %v1173
    %v1175 = vmul.f32 %v1156, 1.442695
    %v1176 = vpow.pop %v1175
    %v1177 = vmul.f32 %v1157, 1.442695
    %v1178 = vpow.pop %v1177
    %v1179 = vmul.f32 %v1158, 1.442695
    %v1180 = vpow.pop %v1179
    %v1181 = vmul.f32 %v1159, 1.442695
    %v1182 = vpow.pop %v1181
    %v1183 = vmul.f32 %v1160, 1.442695
    %v1184 = vpow.pop %v1183
    %v1185 = vmul.f32 %v1161, 1.442695
    %v1186 = vpow.pop %v1185
    %v1187 = vmul.f32 %v1162, 1.442695
    %v1188 = vpow.pop %v1187
    %v1189 = vmul.f32 %v1163, 1.442695
    %v1190 = vpow.pop %v1189
    %v1191 = vmul.f32 %v1164, 1.442695
    %v1192 = vpow.pop %v1191
    %v1193 = vmul.f32 %v1165, 1.442695
    %v1194 = vpow.pop %v1193
    %v1195 = vmul.f32 %v1166, 1.442695
    %v1196 = vpow.pop %v1195
    %v1197 = vmul.f32 %v1167, 1.442695
    %v1198 = vpow.pop %v1197
    %v1199 = vmul.f32 %v1168, 1.442695
    %v1200 = vpow.pop %v1199
    %v1201 = vlaneseq
    %v1202 = vshrl.u32 %v1201, 7
    %v1203 = vsub.s32 0, %v1202
    %v1204 = vrot.slane %v42, %v1203
    %v1205 = vmul.f32 %v1204, %v127
    %v1206 = vmul.f32 %v1204, %v128
    %v1207 = vmul.f32 %v1204, %v129
    %v1208 = vmul.f32 %v1204, %v130
    %v1209 = vmul.f32 %v1204, %v131
    %v1210 = vmul.f32 %v1204, %v132
    %v1211 = vmul.f32 %v1204, %v133
    %v1212 = vmul.f32 %v1204, %v134
    %v1213 = vmul.f32 %v1204, %v135
    %v1214 = vmul.f32 %v1204, %v136
    %v1215 = vmul.f32 %v1204, %v137
    %v1216 = vmul.f32 %v1204, %v138
    %v1217 = vmul.f32 %v1204, %v139
    %v1218 = vmul.f32 %v1204, %v140
    %v1219 = vmul.f32 %v1204, %v141
    %v1220 = vmul.f32 %v1204, %v142
    %v1221 = vlaneseq
    %v1222 = vshrl.u32 %v1221, 7
    %v1223 = vsub.s32 1, %v1222
    %v1224 = vrot.slane %v42, %v1223
    %v1225 = vmul.f32 %v1224, %v227
    %v1226 = vmul.f32 %v1224, %v228
    %v1227 = vmul.f32 %v1224, %v229
    %v1228 = vmul.f32 %v1224, %v230
    %v1229 = vmul.f32 %v1224, %v231
    %v1230 = vmul.f32 %v1224, %v232
    %v1231 = vmul.f32 %v1224, %v233
    %v1232 = vmul.f32 %v1224, %v234
    %v1233 = vmul.f32 %v1224, %v235
    %v1234 = vmul.f32 %v1224, %v236
    %v1235 = vmul.f32 %v1224, %v237
    %v1236 = vmul.f32 %v1224, %v238
    %v1237 = vmul.f32 %v1224, %v239
    %v1238 = vmul.f32 %v1224, %v240
    %v1239 = vmul.f32 %v1224, %v241
    %v1240 = vmul.f32 %v1224, %v242
    %v1241 = vadd.f32 %v1205, %v1225
    %v1242 = vadd.f32 %v1206, %v1226
    %v1243 = vadd.f32 %v1207, %v1227
    %v1244 = vadd.f32 %v1208, %v1228
    %v1245 = vadd.f32 %v1209, %v1229
    %v1246 = vadd.f32 %v1210, %v1230
    %v1247 = vadd.f32 %v1211, %v1231
    %v1248 = vadd.f32 %v1212, %v1232
    %v1249 = vadd.f32 %v1213, %v1233
    %v1250 = vadd.f32 %v1214, %v1234
    %v1251 = vadd.f32 %v1215, %v1235
    %v1252 = vadd.f32 %v1216, %v1236
    %v1253 = vadd.f32 %v1217, %v1237
    %v1254 = vadd.f32 %v1218, %v1238
    %v1255 = vadd.f32 %v1219, %v1239
    %v1256 = vadd.f32 %v1220, %v1240
    %v1257 = vlaneseq
    %v1258 = vshrl.u32 %v1257, 7
    %v1259 = vsub.s32 3, %v1258
    %v1260 = vrot.slane %v42, %v1259
    %v1261 = vmul.f32 %v1260, %v459
    %v1262 = vmul.f32 %v1260, %v460
    %v1263 = vmul.f32 %v1260, %v461
    %v1264 = vmul.f32 %v1260, %v462
    %v1265 = vmul.f32 %v1260, %v463
    %v1266 = vmul.f32 %v1260, %v464
    %v1267 = vmul.f32 %v1260, %v465
    %v1268 = vmul.f32 %v1260, %v466
    %v1269 = vmul.f32 %v1260, %v467
    %v1270 = vmul.f32 %v1260, %v468
    %v1271 = vmul.f32 %v1260, %v469
    %v1272 = vmul.f32 %v1260, %v470
    %v1273 = vmul.f32 %v1260, %v471
    %v1274 = vmul.f32 %v1260, %v472
    %v1275 = vmul.f32 %v1260, %v473
    %v1276 = vmul.f32 %v1260, %v474
    %v1277 = vadd.f32 %v1241, %v1261
    %v1278 = vadd.f32 %v1242, %v1262
    %v1279 = vadd.f32 %v1243, %v1263
    %v1280 = vadd.f32 %v1244, %v1264
    %v1281 = vadd.f32 %v1245, %v1265
    %v1282 = vadd.f32 %v1246, %v1266
    %v1283 = vadd.f32 %v1247, %v1267
    %v1284 = vadd.f32 %v1248, %v1268
    %v1285 = vadd.f32 %v1249, %v1269
    %v1286 = vadd.f32 %v1250, %v1270
    %v1287 = vadd.f32 %v1251, %v1271
    %v1288 = vadd.f32 %v1252, %v1272
    %v1289 = vadd.f32 %v1253, %v1273
    %v1290 = vadd.f32 %v1254, %v1274
    %v1291 = vadd.f32 %v1255, %v1275
    %v1292 = vadd.f32 %v1256, %v1276
    %v1293 = vlaneseq
    %v1294 = vshrl.u32 %v1293, 7
    %v1295 = vsub.s32 2, %v1294
    %v1296 = vrot.slane %v40, %v1295
    %v1297 = vadd.f32 %v1296, %v1277
    %v1298 = vadd.f32 %v1296, %v1278
    %v1299 = vadd.f32 %v1296, %v1279
    %v1300 = vadd.f32 %v1296, %v1280
    %v1301 = vadd.f32 %v1296, %v1281
    %v1302 = vadd.f32 %v1296, %v1282
    %v1303 = vadd.f32 %v1296, %v1283
    %v1304 = vadd.f32 %v1296, %v1284
    %v1305 = vadd.f32 %v1296, %v1285
    %v1306 = vadd.f32 %v1296, %v1286
    %v1307 = vadd.f32 %v1296, %v1287
    %v1308 = vadd.f32 %v1296, %v1288
    %v1309 = vadd.f32 %v1296, %v1289
    %v1310 = vadd.f32 %v1296, %v1290
    %v1311 = vadd.f32 %v1296, %v1291
    %v1312 = vadd.f32 %v1296, %v1292
    %v1313 = vmul.f32 %v1170, %v1297
    %v1314 = vmul.f32 %v1172, %v1298
    %v1315 = vmul.f32 %v1174, %v1299
    %v1316 = vmul.f32 %v1176, %v1300
    %v1317 = vmul.f32 %v1178, %v1301
    %v1318 = vmul.f32 %v1180, %v1302
    %v1319 = vmul.f32 %v1182, %v1303
    %v1320 = vmul.f32 %v1184, %v1304
    %v1321 = vmul.f32 %v1186, %v1305
    %v1322 = vmul.f32 %v1188, %v1306
    %v1323 = vmul.f32 %v1190, %v1307
    %v1324 = vmul.f32 %v1192, %v1308
    %v1325 = vmul.f32 %v1194, %v1309
    %v1326 = vmul.f32 %v1196, %v1310
    %v1327 = vmul.f32 %v1198, %v1311
    %v1328 = vmul.f32 %v1200, %v1312
    %1329 = vadd.xlane.f32.xlu0 %v1313
    %v1330 = vpop.xlane.xlu0 %1329
    %1331 = vadd.xlane.f32.xlu0 %v1314
    %v1332 = vpop.xlane.xlu0 %1331
    %1333 = vadd.xlane.f32.xlu0 %v1315
    %v1334 = vpop.xlane.xlu0 %1333
    %1335 = vadd.xlane.f32.xlu0 %v1316
    %v1336 = vpop.xlane.xlu0 %1335
    %1337 = vadd.xlane.f32.xlu0 %v1317
    %v1338 = vpop.xlane.xlu0 %1337
    %1339 = vadd.xlane.f32.xlu0 %v1318
    %v1340 = vpop.xlane.xlu0 %1339
    %1341 = vadd.xlane.f32.xlu0 %v1319
    %v1342 = vpop.xlane.xlu0 %1341
    %1343 = vadd.xlane.f32.xlu0 %v1320
    %v1344 = vpop.xlane.xlu0 %1343
    %1345 = vadd.xlane.f32.xlu0 %v1321
    %v1346 = vpop.xlane.xlu0 %1345
    %1347 = vadd.xlane.f32.xlu0 %v1322
    %v1348 = vpop.xlane.xlu0 %1347
    %1349 = vadd.xlane.f32.xlu0 %v1323
    %v1350 = vpop.xlane.xlu0 %1349
    %1351 = vadd.xlane.f32.xlu0 %v1324
    %v1352 = vpop.xlane.xlu0 %1351
    %1353 = vadd.xlane.f32.xlu0 %v1325
    %v1354 = vpop.xlane.xlu0 %1353
    %1355 = vadd.xlane.f32.xlu0 %v1326
    %v1356 = vpop.xlane.xlu0 %1355
    %1357 = vadd.xlane.f32.xlu0 %v1327
    %v1358 = vpop.xlane.xlu0 %1357
    %1359 = vadd.xlane.f32.xlu0 %v1328
    %v1360 = vpop.xlane.xlu0 %1359
    %v1361 = vld [vmem:[#allocation2 + $0x2] sm:$0x1]
    %v1378 = vlaneseq
    %v1379 = vshrl.u32 %v1378, 7
    %v1380 = vsub.s32 %v733, %v1379
    %v1381 = vrot.slane %v1330, %v1380
    %v1382 = vlaneseq
    %v1383 = vshrl.u32 %v1382, 7
    %v1384 = vsub.s32 %v738, %v1383
    %v1385 = vrot.slane %v1332, %v1384
    %v1386 = vsel %vm743, %v1385, %v1381
    %v1387 = vlaneseq
    %v1388 = vshrl.u32 %v1387, 7
    %v1389 = vsub.s32 %v745, %v1388
    %v1390 = vrot.slane %v1334, %v1389
    %v1391 = vsel %vm750, %v1390, %v1386
    %v1392 = vlaneseq
    %v1393 = vshrl.u32 %v1392, 7
    %v1394 = vsub.s32 %v752, %v1393
    %v1395 = vrot.slane %v1336, %v1394
    %v1396 = vsel %vm757, %v1395, %v1391
    %v1397 = vlaneseq
    %v1398 = vshrl.u32 %v1397, 7
    %v1399 = vsub.s32 %v759, %v1398
    %v1400 = vrot.slane %v1338, %v1399
    %v1401 = vsel %vm764, %v1400, %v1396
    %v1402 = vlaneseq
    %v1403 = vshrl.u32 %v1402, 7
    %v1404 = vsub.s32 %v766, %v1403
    %v1405 = vrot.slane %v1340, %v1404
    %v1406 = vsel %vm771, %v1405, %v1401
    %v1407 = vlaneseq
    %v1408 = vshrl.u32 %v1407, 7
    %v1409 = vsub.s32 %v773, %v1408
    %v1410 = vrot.slane %v1342, %v1409
    %v1411 = vsel %vm778, %v1410, %v1406
    %v1412 = vlaneseq
    %v1413 = vshrl.u32 %v1412, 7
    %v1414 = vsub.s32 %v780, %v1413
    %v1415 = vrot.slane %v1344, %v1414
    %v1416 = vsel %vm785, %v1415, %v1411
    %v1417 = vlaneseq
    %v1418 = vshrl.u32 %v1417, 7
    %v1419 = vsub.s32 %v787, %v1418
    %v1420 = vrot.slane %v1346, %v1419
    %v1421 = vsel %vm792, %v1420, %v1416
    %v1422 = vlaneseq
    %v1423 = vshrl.u32 %v1422, 7
    %v1424 = vsub.s32 %v794, %v1423
    %v1425 = vrot.slane %v1348, %v1424
    %v1426 = vsel %vm799, %v1425, %v1421
    %v1427 = vlaneseq
    %v1428 = vshrl.u32 %v1427, 7
    %v1429 = vsub.s32 %v801, %v1428
    %v1430 = vrot.slane %v1350, %v1429
    %v1431 = vsel %vm806, %v1430, %v1426
    %v1432 = vlaneseq
    %v1433 = vshrl.u32 %v1432, 7
    %v1434 = vsub.s32 %v808, %v1433
    %v1435 = vrot.slane %v1352, %v1434
    %v1436 = vsel %vm813, %v1435, %v1431
    %v1437 = vlaneseq
    %v1438 = vshrl.u32 %v1437, 7
    %v1439 = vsub.s32 %v815, %v1438
    %v1440 = vrot.slane %v1354, %v1439
    %v1441 = vsel %vm820, %v1440, %v1436
    %v1442 = vlaneseq
    %v1443 = vshrl.u32 %v1442, 7
    %v1444 = vsub.s32 %v822, %v1443
    %v1445 = vrot.slane %v1356, %v1444
    %v1446 = vsel %vm827, %v1445, %v1441
    %v1447 = vlaneseq
    %v1448 = vshrl.u32 %v1447, 7
    %v1449 = vsub.s32 %v829, %v1448
    %v1450 = vrot.slane %v1358, %v1449
    %v1451 = vsel %vm834, %v1450, %v1446
    %v1452 = vlaneseq
    %v1453 = vshrl.u32 %v1452, 7
    %v1454 = vsub.s32 %v836, %v1453
    %v1455 = vrot.slane %v1360, %v1454
    %v1456 = vsel %vm841, %v1455, %v1451
    %v1458 = vadd.f32 %v1361, %v1456
    %1459 = vst [vmem:[#allocation2 + $0x2] sm:$0x1] %v1458
    %v1460 = vsub.f32 %v475, %v491
    %v1461 = vsub.f32 %v476, %v492
    %v1462 = vsub.f32 %v477, %v493
    %v1463 = vsub.f32 %v478, %v494
    %v1464 = vsub.f32 %v479, %v495
    %v1465 = vsub.f32 %v480, %v496
    %v1466 = vsub.f32 %v481, %v497
    %v1467 = vsub.f32 %v482, %v498
    %v1468 = vsub.f32 %v483, %v499
    %v1469 = vsub.f32 %v484, %v500
    %v1470 = vsub.f32 %v485, %v501
    %v1471 = vsub.f32 %v486, %v502
    %v1472 = vsub.f32 %v487, %v503
    %v1473 = vsub.f32 %v488, %v504
    %v1474 = vsub.f32 %v489, %v505
    %v1475 = vsub.f32 %v490, %v506
    %v1476 = vmul.f32 %v1460, 1.442695
    %v1477 = vpow.pop %v1476
    %v1478 = vmul.f32 %v1461, 1.442695
    %v1479 = vpow.pop %v1478
    %v1480 = vmul.f32 %v1462, 1.442695
    %v1481 = vpow.pop %v1480
    %v1482 = vmul.f32 %v1463, 1.442695
    %v1483 = vpow.pop %v1482
    %v1484 = vmul.f32 %v1464, 1.442695
    %v1485 = vpow.pop %v1484
    %v1486 = vmul.f32 %v1465, 1.442695
    %v1487 = vpow.pop %v1486
    %v1488 = vmul.f32 %v1466, 1.442695
    %v1489 = vpow.pop %v1488
    %v1490 = vmul.f32 %v1467, 1.442695
    %v1491 = vpow.pop %v1490
    %v1492 = vmul.f32 %v1468, 1.442695
    %v1493 = vpow.pop %v1492
    %v1494 = vmul.f32 %v1469, 1.442695
    %v1495 = vpow.pop %v1494
    %v1496 = vmul.f32 %v1470, 1.442695
    %v1497 = vpow.pop %v1496
    %v1498 = vmul.f32 %v1471, 1.442695
    %v1499 = vpow.pop %v1498
    %v1500 = vmul.f32 %v1472, 1.442695
    %v1501 = vpow.pop %v1500
    %v1502 = vmul.f32 %v1473, 1.442695
    %v1503 = vpow.pop %v1502
    %v1504 = vmul.f32 %v1474, 1.442695
    %v1505 = vpow.pop %v1504
    %v1506 = vmul.f32 %v1475, 1.442695
    %v1507 = vpow.pop %v1506
    %v1508 = vlaneseq
    %v1509 = vshrl.u32 %v1508, 7
    %v1510 = vsub.s32 4, %v1509
    %v1511 = vrot.slane %v42, %v1510
    %v1512 = vmul.f32 %v1511, %v127
    %v1513 = vmul.f32 %v1511, %v128
    %v1514 = vmul.f32 %v1511, %v129
    %v1515 = vmul.f32 %v1511, %v130
    %v1516 = vmul.f32 %v1511, %v131
    %v1517 = vmul.f32 %v1511, %v132
    %v1518 = vmul.f32 %v1511, %v133
    %v1519 = vmul.f32 %v1511, %v134
    %v1520 = vmul.f32 %v1511, %v135
    %v1521 = vmul.f32 %v1511, %v136
    %v1522 = vmul.f32 %v1511, %v137
    %v1523 = vmul.f32 %v1511, %v138
    %v1524 = vmul.f32 %v1511, %v139
    %v1525 = vmul.f32 %v1511, %v140
    %v1526 = vmul.f32 %v1511, %v141
    %v1527 = vmul.f32 %v1511, %v142
    %v1528 = vlaneseq
    %v1529 = vshrl.u32 %v1528, 7
    %v1530 = vsub.s32 5, %v1529
    %v1531 = vrot.slane %v42, %v1530
    %v1532 = vmul.f32 %v1531, %v227
    %v1533 = vmul.f32 %v1531, %v228
    %v1534 = vmul.f32 %v1531, %v229
    %v1535 = vmul.f32 %v1531, %v230
    %v1536 = vmul.f32 %v1531, %v231
    %v1537 = vmul.f32 %v1531, %v232
    %v1538 = vmul.f32 %v1531, %v233
    %v1539 = vmul.f32 %v1531, %v234
    %v1540 = vmul.f32 %v1531, %v235
    %v1541 = vmul.f32 %v1531, %v236
    %v1542 = vmul.f32 %v1531, %v237
    %v1543 = vmul.f32 %v1531, %v238
    %v1544 = vmul.f32 %v1531, %v239
    %v1545 = vmul.f32 %v1531, %v240
    %v1546 = vmul.f32 %v1531, %v241
    %v1547 = vmul.f32 %v1531, %v242
    %v1548 = vadd.f32 %v1512, %v1532
    %v1549 = vadd.f32 %v1513, %v1533
    %v1550 = vadd.f32 %v1514, %v1534
    %v1551 = vadd.f32 %v1515, %v1535
    %v1552 = vadd.f32 %v1516, %v1536
    %v1553 = vadd.f32 %v1517, %v1537
    %v1554 = vadd.f32 %v1518, %v1538
    %v1555 = vadd.f32 %v1519, %v1539
    %v1556 = vadd.f32 %v1520, %v1540
    %v1557 = vadd.f32 %v1521, %v1541
    %v1558 = vadd.f32 %v1522, %v1542
    %v1559 = vadd.f32 %v1523, %v1543
    %v1560 = vadd.f32 %v1524, %v1544
    %v1561 = vadd.f32 %v1525, %v1545
    %v1562 = vadd.f32 %v1526, %v1546
    %v1563 = vadd.f32 %v1527, %v1547
    %v1564 = vlaneseq
    %v1565 = vshrl.u32 %v1564, 7
    %v1566 = vsub.s32 6, %v1565
    %v1567 = vrot.slane %v42, %v1566
    %v1568 = vmul.f32 %v1567, %v343
    %v1569 = vmul.f32 %v1567, %v344
    %v1570 = vmul.f32 %v1567, %v345
    %v1571 = vmul.f32 %v1567, %v346
    %v1572 = vmul.f32 %v1567, %v347
    %v1573 = vmul.f32 %v1567, %v348
    %v1574 = vmul.f32 %v1567, %v349
    %v1575 = vmul.f32 %v1567, %v350
    %v1576 = vmul.f32 %v1567, %v351
    %v1577 = vmul.f32 %v1567, %v352
    %v1578 = vmul.f32 %v1567, %v353
    %v1579 = vmul.f32 %v1567, %v354
    %v1580 = vmul.f32 %v1567, %v355
    %v1581 = vmul.f32 %v1567, %v356
    %v1582 = vmul.f32 %v1567, %v357
    %v1583 = vmul.f32 %v1567, %v358
    %v1584 = vadd.f32 %v1548, %v1568
    %v1585 = vadd.f32 %v1549, %v1569
    %v1586 = vadd.f32 %v1550, %v1570
    %v1587 = vadd.f32 %v1551, %v1571
    %v1588 = vadd.f32 %v1552, %v1572
    %v1589 = vadd.f32 %v1553, %v1573
    %v1590 = vadd.f32 %v1554, %v1574
    %v1591 = vadd.f32 %v1555, %v1575
    %v1592 = vadd.f32 %v1556, %v1576
    %v1593 = vadd.f32 %v1557, %v1577
    %v1594 = vadd.f32 %v1558, %v1578
    %v1595 = vadd.f32 %v1559, %v1579
    %v1596 = vadd.f32 %v1560, %v1580
    %v1597 = vadd.f32 %v1561, %v1581
    %v1598 = vadd.f32 %v1562, %v1582
    %v1599 = vadd.f32 %v1563, %v1583
    %v1600 = vlaneseq
    %v1601 = vshrl.u32 %v1600, 7
    %v1602 = vsub.s32 3, %v1601
    %v1603 = vrot.slane %v40, %v1602
    %v1604 = vadd.f32 %v1603, %v1584
    %v1605 = vadd.f32 %v1603, %v1585
    %v1606 = vadd.f32 %v1603, %v1586
    %v1607 = vadd.f32 %v1603, %v1587
    %v1608 = vadd.f32 %v1603, %v1588
    %v1609 = vadd.f32 %v1603, %v1589
    %v1610 = vadd.f32 %v1603, %v1590
    %v1611 = vadd.f32 %v1603, %v1591
    %v1612 = vadd.f32 %v1603, %v1592
    %v1613 = vadd.f32 %v1603, %v1593
    %v1614 = vadd.f32 %v1603, %v1594
    %v1615 = vadd.f32 %v1603, %v1595
    %v1616 = vadd.f32 %v1603, %v1596
    %v1617 = vadd.f32 %v1603, %v1597
    %v1618 = vadd.f32 %v1603, %v1598
    %v1619 = vadd.f32 %v1603, %v1599
    %v1620 = vmul.f32 %v1477, %v1604
    %v1621 = vmul.f32 %v1479, %v1605
    %v1622 = vmul.f32 %v1481, %v1606
    %v1623 = vmul.f32 %v1483, %v1607
    %v1624 = vmul.f32 %v1485, %v1608
    %v1625 = vmul.f32 %v1487, %v1609
    %v1626 = vmul.f32 %v1489, %v1610
    %v1627 = vmul.f32 %v1491, %v1611
    %v1628 = vmul.f32 %v1493, %v1612
    %v1629 = vmul.f32 %v1495, %v1613
    %v1630 = vmul.f32 %v1497, %v1614
    %v1631 = vmul.f32 %v1499, %v1615
    %v1632 = vmul.f32 %v1501, %v1616
    %v1633 = vmul.f32 %v1503, %v1617
    %v1634 = vmul.f32 %v1505, %v1618
    %v1635 = vmul.f32 %v1507, %v1619
    %1636 = vadd.xlane.f32.xlu0 %v1620
    %v1637 = vpop.xlane.xlu0 %1636
    %1638 = vadd.xlane.f32.xlu0 %v1621
    %v1639 = vpop.xlane.xlu0 %1638
    %1640 = vadd.xlane.f32.xlu0 %v1622
    %v1641 = vpop.xlane.xlu0 %1640
    %1642 = vadd.xlane.f32.xlu0 %v1623
    %v1643 = vpop.xlane.xlu0 %1642
    %1644 = vadd.xlane.f32.xlu0 %v1624
    %v1645 = vpop.xlane.xlu0 %1644
    %1646 = vadd.xlane.f32.xlu0 %v1625
    %v1647 = vpop.xlane.xlu0 %1646
    %1648 = vadd.xlane.f32.xlu0 %v1626
    %v1649 = vpop.xlane.xlu0 %1648
    %1650 = vadd.xlane.f32.xlu0 %v1627
    %v1651 = vpop.xlane.xlu0 %1650
    %1652 = vadd.xlane.f32.xlu0 %v1628
    %v1653 = vpop.xlane.xlu0 %1652
    %1654 = vadd.xlane.f32.xlu0 %v1629
    %v1655 = vpop.xlane.xlu0 %1654
    %1656 = vadd.xlane.f32.xlu0 %v1630
    %v1657 = vpop.xlane.xlu0 %1656
    %1658 = vadd.xlane.f32.xlu0 %v1631
    %v1659 = vpop.xlane.xlu0 %1658
    %1660 = vadd.xlane.f32.xlu0 %v1632
    %v1661 = vpop.xlane.xlu0 %1660
    %1662 = vadd.xlane.f32.xlu0 %v1633
    %v1663 = vpop.xlane.xlu0 %1662
    %1664 = vadd.xlane.f32.xlu0 %v1634
    %v1665 = vpop.xlane.xlu0 %1664
    %1666 = vadd.xlane.f32.xlu0 %v1635
    %v1667 = vpop.xlane.xlu0 %1666
    %v1668 = vld [vmem:[#allocation2 + $0x3] sm:$0x1]
    %v1685 = vlaneseq
    %v1686 = vshrl.u32 %v1685, 7
    %v1687 = vsub.s32 %v733, %v1686
    %v1688 = vrot.slane %v1637, %v1687
    %v1689 = vlaneseq
    %v1690 = vshrl.u32 %v1689, 7
    %v1691 = vsub.s32 %v738, %v1690
    %v1692 = vrot.slane %v1639, %v1691
    %v1693 = vsel %vm743, %v1692, %v1688
    %v1694 = vlaneseq
    %v1695 = vshrl.u32 %v1694, 7
    %v1696 = vsub.s32 %v745, %v1695
    %v1697 = vrot.slane %v1641, %v1696
    %v1698 = vsel %vm750, %v1697, %v1693
    %v1699 = vlaneseq
    %v1700 = vshrl.u32 %v1699, 7
    %v1701 = vsub.s32 %v752, %v1700
    %v1702 = vrot.slane %v1643, %v1701
    %v1703 = vsel %vm757, %v1702, %v1698
    %v1704 = vlaneseq
    %v1705 = vshrl.u32 %v1704, 7
    %v1706 = vsub.s32 %v759, %v1705
    %v1707 = vrot.slane %v1645, %v1706
    %v1708 = vsel %vm764, %v1707, %v1703
    %v1709 = vlaneseq
    %v1710 = vshrl.u32 %v1709, 7
    %v1711 = vsub.s32 %v766, %v1710
    %v1712 = vrot.slane %v1647, %v1711
    %v1713 = vsel %vm771, %v1712, %v1708
    %v1714 = vlaneseq
    %v1715 = vshrl.u32 %v1714, 7
    %v1716 = vsub.s32 %v773, %v1715
    %v1717 = vrot.slane %v1649, %v1716
    %v1718 = vsel %vm778, %v1717, %v1713
    %v1719 = vlaneseq
    %v1720 = vshrl.u32 %v1719, 7
    %v1721 = vsub.s32 %v780, %v1720
    %v1722 = vrot.slane %v1651, %v1721
    %v1723 = vsel %vm785, %v1722, %v1718
    %v1724 = vlaneseq
    %v1725 = vshrl.u32 %v1724, 7
    %v1726 = vsub.s32 %v787, %v1725
    %v1727 = vrot.slane %v1653, %v1726
    %v1728 = vsel %vm792, %v1727, %v1723
    %v1729 = vlaneseq
    %v1730 = vshrl.u32 %v1729, 7
    %v1731 = vsub.s32 %v794, %v1730
    %v1732 = vrot.slane %v1655, %v1731
    %v1733 = vsel %vm799, %v1732, %v1728
    %v1734 = vlaneseq
    %v1735 = vshrl.u32 %v1734, 7
    %v1736 = vsub.s32 %v801, %v1735
    %v1737 = vrot.slane %v1657, %v1736
    %v1738 = vsel %vm806, %v1737, %v1733
    %v1739 = vlaneseq
    %v1740 = vshrl.u32 %v1739, 7
    %v1741 = vsub.s32 %v808, %v1740
    %v1742 = vrot.slane %v1659, %v1741
    %v1743 = vsel %vm813, %v1742, %v1738
    %v1744 = vlaneseq
    %v1745 = vshrl.u32 %v1744, 7
    %v1746 = vsub.s32 %v815, %v1745
    %v1747 = vrot.slane %v1661, %v1746
    %v1748 = vsel %vm820, %v1747, %v1743
    %v1749 = vlaneseq
    %v1750 = vshrl.u32 %v1749, 7
    %v1751 = vsub.s32 %v822, %v1750
    %v1752 = vrot.slane %v1663, %v1751
    %v1753 = vsel %vm827, %v1752, %v1748
    %v1754 = vlaneseq
    %v1755 = vshrl.u32 %v1754, 7
    %v1756 = vsub.s32 %v829, %v1755
    %v1757 = vrot.slane %v1665, %v1756
    %v1758 = vsel %vm834, %v1757, %v1753
    %v1759 = vlaneseq
    %v1760 = vshrl.u32 %v1759, 7
    %v1761 = vsub.s32 %v836, %v1760
    %v1762 = vrot.slane %v1667, %v1761
    %v1763 = vsel %vm841, %v1762, %v1758
    %v1765 = vadd.f32 %v1668, %v1763
    %1766 = vst [vmem:[#allocation2 + $0x3] sm:$0x1] %v1765
    // Predicated region
    $region22: #{tpu_custom_call.1} parent=1 // pred_check
      %p1767 = pneg %p18
    $region23: #{tpu_custom_call.1} parent=1 // pred_check_branch
      %1769 = sbr.rel (%p1767) target = $region25
    $region24: #{tpu_custom_call.1} parent=1 // pred_region
      %v1770 = vld [vmem:[#allocation2] sm:$0xf]
      %v1771 = vlaneseq
      %v1772 = vshrl.u32 %v1771, 7
      %vm1773 = vcmp.eq.s32.totalorder %v1772, 0
      %v1774 = vsel %vm1773, 0.0, %v1770
      %1775 = vst [vmem:[#allocation3] sm:$0xf] %v1774
    $region25: #{tpu_custom_call.1} parent=1 // pred_fallthru
      _
    // Predicated region
    $region26: #{tpu_custom_call.1} parent=1 // pred_check
      _
    $region27: #{tpu_custom_call.1} parent=1 // pred_check_branch
      %1777 = sbr.rel (0) target = $region29
    $region28: #{tpu_custom_call.1} parent=1 // pred_region
      %s1779 = ssub.s32 64, 64
      %1780 = vsyncadd [#allocation4], %s1779
      %s1782 = sshll.u32 [#allocation3], 4
      %s1783 = int_to_ptr.vmem [resolvable:$true] %s1782
      %1785 = dma.vmem_to_hbm [thread:$0]  %s1783, 64, %s4, [#allocation4]
    $region29: #{tpu_custom_call.1} parent=1 // pred_fallthru
      _
    // Predicated region
    $region30: #{tpu_custom_call.1} parent=1 // pred_check
      _
    $region31: #{tpu_custom_call.1} parent=1 // pred_check_branch
      %1787 = sbr.rel (0) target = $region33
    $region32: #{tpu_custom_call.1} parent=1 // pred_region
      %1788 = dma.done [#allocation4], 64
    $region33: #{tpu_custom_call.1} parent=1 // pred_fallthru
      _
    %1789 = vsyncpa [#allocation4], 1

</llo_original>
